<compile_context>
chip_gen: v6e
topology: v6e:2x2x1
jax: 0.10.0
libtpu: 0.0.40
codegen_flags: <defaults>
</compile_context>

<pallas_src>
import numpy as np
import jax
import jax.numpy as jnp
from jax import lax
from jax.experimental import pallas as pl
from jax.experimental.pallas import tpu as pltpu


def _pick_batch_block(B):
    """Images folded per grid step.  Batching >1 amortizes per-step overhead, but keep
    >=2 grid steps when possible so the 'parallel' axis can feed both TensorCores."""
    if B <= 1:
        return 1
    target = max(1, min(8, B // 2))
    for cand in range(target, 0, -1):
        if B % cand == 0:
            return cand
    return 1


def _make_residual_kernel(k, W, Cout, N, has_skip):
    """Fused ResidualBlock body on channel-major (C, N = bblk*H*W) slabs."""
    p = k // 2
    kk = k * k
    # Static lane shift per tap: rolled[q] == x[q + ((dy-p)*W + (dx-p))] (masked where
    # the tap would read outside the image).
    shifts = []
    for dy in range(k):
        for dx in range(k):
            s = (dy - p) * W + (dx - p)
            shifts.append((-s) % N)
    center = p * k + p

    def kernel(*refs):
        if has_skip:
            (x_ref, m_ref, w1_ref, b1_ref, w2_ref, b2_ref,
             ws_ref, bs_ref, o_ref) = refs
        else:
            (x_ref, m_ref, w1_ref, b1_ref, w2_ref, b2_ref, o_ref) = refs

        x = x_ref[...]        # (Cin, N) f32, lane-dense
        masks = m_ref[...]    # (k*k, N) f32 tap-validity masks (1.0 / 0.0)

        def conv(inp, w_ref):
            # k*k shift-and-accumulate MXU matmuls: W_tap(Cout,C) @ shift(inp)(C,N).
            # TODO(synk): fold the k*k taps into a single K=k*k*C matmul by sublane-
            # stacking the shifted slabs once unaligned sublane concat is verified.
            acc = jnp.zeros((Cout, N), jnp.float32)
            for t in range(kk):
                sh = shifts[t]
                src = inp if sh == 0 else pltpu.roll(inp, shift=sh, axis=1)
                slab = src if t == center else src * masks[t:t + 1, :]
                acc = acc + jnp.dot(w_ref[t], slab,
                                    preferred_element_type=jnp.float32)
            return acc

        # conv1 + bias + ReLU (kept resident in vregs -- no VMEM scratch round-trip).
        y1 = jnp.maximum(conv(x, w1_ref) + b1_ref[...], 0.0)
        # conv2 + bias.
        out = conv(y1, w2_ref) + b2_ref[...]
        # Fused skip path.
        if has_skip:
            out = out + jnp.dot(ws_ref[...], x,
                                preferred_element_type=jnp.float32) + bs_ref[...]
        else:
            out = out + x          # identity skip (Cin == Cout)
        o_ref[...] = out.astype(o_ref.dtype)   # lane-dense store (last dim = N)

    return kernel


def residual_block(x_nchw, params, kernel_size):
    """ResidualBlock forward.  x_nchw: (B, Cin, H, W) f32.  params: torch-layout weights."""
    B, Cin, H, W = x_nchw.shape
    Cout = params["w1"].shape[0]
    k = kernel_size
    p = k // 2
    HW = H * W
    kk = k * k
    has_skip = Cin != Cout
    assert ("ws" in params) == has_skip, "skip params must match (in_ch != out_ch)"
    if not has_skip:
        assert Cin == Cout  # identity skip requires matching channel counts

    bblk = _pick_batch_block(B)
    if (bblk * HW) % 128 != 0:     # block lane width must be 128-aligned (or full batch)
        bblk = B
    nb = B // bblk
    N = bblk * HW

    # --- glue: NCHW -> channel-major flat (C, B*H*W); torch weights -> (k*k, Cout, C) ---
    x = jnp.transpose(x_nchw.astype(jnp.float32), (1, 0, 2, 3)).reshape(Cin, B * HW)
    w1 = jnp.transpose(params["w1"], (2, 3, 0, 1)).reshape(kk, Cout, Cin).astype(jnp.float32)
    w2 = jnp.transpose(params["w2"], (2, 3, 0, 1)).reshape(kk, Cout, Cout).astype(jnp.float32)
    b1 = params["b1"].reshape(Cout, 1).astype(jnp.float32)
    b2 = params["b2"].reshape(Cout, 1).astype(jnp.float32)

    # Per-tap validity masks on the (image-major, row-major) flat lane axis.
    q = np.arange(HW)
    ii, jj = q // W, q % W
    masks_np = np.empty((kk, HW), np.float32)
    for dy in range(k):
        for dx in range(k):
            e, d = dy - p, dx - p
            masks_np[dy * k + dx] = (((ii + e) >= 0) & ((ii + e) < H) &
                                     ((jj + d) >= 0) & ((jj + d) < W)).astype(np.float32)
    masks = jnp.asarray(np.tile(masks_np, (1, bblk)))       # (k*k, N)

    inputs = [x, masks, w1, b1, w2, b2]
    in_specs = [
        pl.BlockSpec((Cin, N), lambda b: (0, b)),             # activations (lane-dense)
        pl.BlockSpec((kk, N), lambda b: (0, 0)),              # tap validity masks
        pl.BlockSpec((kk, Cout, Cin), lambda b: (0, 0, 0)),   # conv1 weights
        pl.BlockSpec((Cout, 1), lambda b: (0, 0)),            # conv1 bias
        pl.BlockSpec((kk, Cout, Cout), lambda b: (0, 0, 0)),  # conv2 weights
        pl.BlockSpec((Cout, 1), lambda b: (0, 0)),            # conv2 bias
    ]
    if has_skip:
        ws = params["ws"].reshape(Cout, Cin).astype(jnp.float32)
        bs = params["bs"].reshape(Cout, 1).astype(jnp.float32)
        inputs += [ws, bs]
        in_specs += [
            pl.BlockSpec((Cout, Cin), lambda b: (0, 0)),      # 1x1 skip weight
            pl.BlockSpec((Cout, 1), lambda b: (0, 0)),        # skip bias
        ]

    # TODO(synk): on v6e/v7x cast MXU operands to bf16 (keep f32 accumulation) once
    # channel counts are large enough that the tight f32 test tolerance no longer binds.
    # TODO(synk): for large feature maps add a spatial row-strip grid axis (k//2 halo)
    # and set pltpu.CompilerParams(vmem_limit_bytes=...) to fit v7x's 64 MiB VMEM.
    out = pl.pallas_call(
        _make_residual_kernel(k, W, Cout, N, has_skip),
        out_shape=jax.ShapeDtypeStruct((Cout, B * HW), jnp.float32),
        grid=(nb,),
        in_specs=in_specs,
        out_specs=pl.BlockSpec((Cout, N), lambda b: (0, b)),  # lane-dense output block
        compiler_params=pltpu.CompilerParams(dimension_semantics=("parallel",)),
    )(*inputs)

    # (Cout, B*H*W) -> (B, Cout, H, W)
    return jnp.transpose(out.reshape(Cout, B, H, W), (1, 0, 2, 3))


def _reference(x, params, k):
    """Pure-JAX reference mirroring the PyTorch ResidualBlock forward."""
    p = k // 2
    dn = ("NCHW", "OIHW", "NCHW")
    y = lax.conv_general_dilated(x, params["w1"], (1, 1), [(p, p), (p, p)],
                                 dimension_numbers=dn)
    y = y + params["b1"][None, :, None, None]
    y = jnp.maximum(y, 0.0)
    y = lax.conv_general_dilated(y, params["w2"], (1, 1), [(p, p), (p, p)],
                                 dimension_numbers=dn)
    y = y + params["b2"][None, :, None, None]
    if "ws" in params:
        idn = lax.conv_general_dilated(x, params["ws"], (1, 1), [(0, 0), (0, 0)],
                                       dimension_numbers=dn)
        idn = idn + params["bs"][None, :, None, None]
    else:
        idn = x
    return y + idn


def _make_params(key, cin, cout, ksz):
    ks = jax.random.split(key, 6)
    params = {
        "w1": jax.random.normal(ks[0], (cout, cin, ksz, ksz), jnp.float32) * 0.1,
        "b1": jax.random.normal(ks[1], (cout,), jnp.float32) * 0.1,
        "w2": jax.random.normal(ks[2], (cout, cout, ksz, ksz), jnp.float32) * 0.1,
        "b2": jax.random.normal(ks[3], (cout,), jnp.float32) * 0.1,
    }
    if cin != cout:
        params["ws"] = jax.random.normal(ks[4], (cout, cin, 1, 1), jnp.float32) * 0.1
        params["bs"] = jax.random.normal(ks[5], (cout,), jnp.float32) * 0.1
    return params


if __name__ == "__main__":
    key = jax.random.PRNGKey(0)
    k1, k2, k3, k4 = jax.random.split(key, 4)
    B, H, W, ksize = 2, 16, 16, 3

    # Case 1: in_ch != out_ch -> 1x1-conv skip path.
    params1 = _make_params(k1, 4, 8, ksize)
    x1 = jax.random.normal(k2, (B, 4, H, W), jnp.float32)
    out1 = jax.block_until_ready(residual_block(x1, params1, ksize))
    ref1 = _reference(x1, params1, ksize)
    np.testing.assert_allclose(np.asarray(out1), np.asarray(ref1), atol=1e-4, rtol=1e-4)

    # Case 2: in_ch == out_ch -> identity skip path.
    params2 = _make_params(k3, 8, 8, ksize)
    x2 = jax.random.normal(k4, (B, 8, H, W), jnp.float32)
    out2 = jax.block_until_ready(residual_block(x2, params2, ksize))
    ref2 = _reference(x2, params2, ksize)
    np.testing.assert_allclose(np.asarray(out2), np.asarray(ref2), atol=1e-4, rtol=1e-4)

    print("KERNEL_OK")
</pallas_src>

<mosaic_0001>
module attributes {stable_mosaic.version = 11 : i64} {
  func.func @kernel(%arg0: i32, %arg1: memref<4x256xf32, #tpu.memory_space<vmem>>, %arg2: memref<9x256xf32, #tpu.memory_space<vmem>>, %arg3: memref<9x8x4xf32, #tpu.memory_space<vmem>>, %arg4: memref<8x1xf32, #tpu.memory_space<vmem>>, %arg5: memref<9x8x8xf32, #tpu.memory_space<vmem>>, %arg6: memref<8x1xf32, #tpu.memory_space<vmem>>, %arg7: memref<8x4xf32, #tpu.memory_space<vmem>>, %arg8: memref<8x1xf32, #tpu.memory_space<vmem>>, %arg9: memref<8x256xf32, #tpu.memory_space<vmem>>) attributes {dimension_semantics = [#tpu.dimension_semantics<parallel>], iteration_bounds = array<i64: 2>, scalar_prefetch = 0 : i64, scratch_operands = 0 : i64, tpu.core_type = #tpu.core_type<tc>, window_params = [{transform_indices = @transform_0, window_bounds = array<i64: 4, 256>}, {pipeline_mode = #tpu.pipeline_mode<synchronous>, transform_indices = @transform_1, window_bounds = array<i64: 9, 256>}, {pipeline_mode = #tpu.pipeline_mode<synchronous>, transform_indices = @transform_2, window_bounds = array<i64: 9, 8, 4>}, {pipeline_mode = #tpu.pipeline_mode<synchronous>, transform_indices = @transform_3, window_bounds = array<i64: 8, 1>}, {pipeline_mode = #tpu.pipeline_mode<synchronous>, transform_indices = @transform_4, window_bounds = array<i64: 9, 8, 8>}, {pipeline_mode = #tpu.pipeline_mode<synchronous>, transform_indices = @transform_5, window_bounds = array<i64: 8, 1>}, {pipeline_mode = #tpu.pipeline_mode<synchronous>, transform_indices = @transform_6, window_bounds = array<i64: 8, 4>}, {pipeline_mode = #tpu.pipeline_mode<synchronous>, transform_indices = @transform_7, window_bounds = array<i64: 8, 1>}, {transform_indices = @transform_8, window_bounds = array<i64: 8, 256>}]} {
    %c0 = arith.constant 0 : index
    %c0_0 = arith.constant 0 : index
    %0 = vector.load %arg1[%c0, %c0_0] : memref<4x256xf32, #tpu.memory_space<vmem>>, vector<4x256xf32>
    %c0_1 = arith.constant 0 : index
    %c0_2 = arith.constant 0 : index
    %1 = vector.load %arg2[%c0_1, %c0_2] : memref<9x256xf32, #tpu.memory_space<vmem>>, vector<9x256xf32>
    %cst = arith.constant 0.000000e+00 : f32
    %2 = vector.broadcast %cst : f32 to vector<8x256xf32>
    %c17_i32 = arith.constant 17 : i32
    %3 = tpu.dynamic_rotate %0 by %c17_i32 dim 1 : vector<4x256xf32>, i32 -> vector<4x256xf32>
    %4 = vector.extract_strided_slice %1 {offsets = [0, 0], sizes = [1, 256], strides = [1, 1]} : vector<9x256xf32> to vector<1x256xf32>
    %5 = vector.broadcast %4 : vector<1x256xf32> to vector<4x256xf32>
    %6 = arith.mulf %3, %5 : vector<4x256xf32>
    %c0_3 = arith.constant 0 : index
    %c0_4 = arith.constant 0 : index
    %c0_5 = arith.constant 0 : index
    %7 = vector.load %arg3[%c0_3, %c0_4, %c0_5] : memref<9x8x4xf32, #tpu.memory_space<vmem>>, vector<1x8x4xf32>
    %8 = vector.shape_cast %7 : vector<1x8x4xf32> to vector<8x4xf32>
    %cst_6 = arith.constant dense<0.000000e+00> : vector<8x256xf32>
    %9 = tpu.matmul %8, %6, %cst_6 {dimension_numbers = #tpu.dot_dimension_numbers<[1], [0], [0], [1], [0, 0, 1, 1], [], []>} : vector<8x4xf32>, vector<4x256xf32>, vector<8x256xf32> -> vector<8x256xf32>
    %10 = arith.addf %2, %9 : vector<8x256xf32>
    %c16_i32 = arith.constant 16 : i32
    %11 = tpu.dynamic_rotate %0 by %c16_i32 dim 1 : vector<4x256xf32>, i32 -> vector<4x256xf32>
    %12 = vector.extract_strided_slice %1 {offsets = [1, 0], sizes = [1, 256], strides = [1, 1]} : vector<9x256xf32> to vector<1x256xf32>
    %13 = vector.broadcast %12 : vector<1x256xf32> to vector<4x256xf32>
    %14 = arith.mulf %11, %13 : vector<4x256xf32>
    %c1 = arith.constant 1 : index
    %c0_7 = arith.constant 0 : index
    %c0_8 = arith.constant 0 : index
    %15 = vector.load %arg3[%c1, %c0_7, %c0_8] : memref<9x8x4xf32, #tpu.memory_space<vmem>>, vector<1x8x4xf32>
    %16 = vector.shape_cast %15 : vector<1x8x4xf32> to vector<8x4xf32>
    %cst_9 = arith.constant dense<0.000000e+00> : vector<8x256xf32>
    %17 = tpu.matmul %16, %14, %cst_9 {dimension_numbers = #tpu.dot_dimension_numbers<[1], [0], [0], [1], [0, 0, 1, 1], [], []>} : vector<8x4xf32>, vector<4x256xf32>, vector<8x256xf32> -> vector<8x256xf32>
    %18 = arith.addf %10, %17 : vector<8x256xf32>
    %c15_i32 = arith.constant 15 : i32
    %19 = tpu.dynamic_rotate %0 by %c15_i32 dim 1 : vector<4x256xf32>, i32 -> vector<4x256xf32>
    %20 = vector.extract_strided_slice %1 {offsets = [2, 0], sizes = [1, 256], strides = [1, 1]} : vector<9x256xf32> to vector<1x256xf32>
    %21 = vector.broadcast %20 : vector<1x256xf32> to vector<4x256xf32>
    %22 = arith.mulf %19, %21 : vector<4x256xf32>
    %c2 = arith.constant 2 : index
    %c0_10 = arith.constant 0 : index
    %c0_11 = arith.constant 0 : index
    %23 = vector.load %arg3[%c2, %c0_10, %c0_11] : memref<9x8x4xf32, #tpu.memory_space<vmem>>, vector<1x8x4xf32>
    %24 = vector.shape_cast %23 : vector<1x8x4xf32> to vector<8x4xf32>
    %cst_12 = arith.constant dense<0.000000e+00> : vector<8x256xf32>
    %25 = tpu.matmul %24, %22, %cst_12 {dimension_numbers = #tpu.dot_dimension_numbers<[1], [0], [0], [1], [0, 0, 1, 1], [], []>} : vector<8x4xf32>, vector<4x256xf32>, vector<8x256xf32> -> vector<8x256xf32>
    %26 = arith.addf %18, %25 : vector<8x256xf32>
    %c1_i32 = arith.constant 1 : i32
    %27 = tpu.dynamic_rotate %0 by %c1_i32 dim 1 : vector<4x256xf32>, i32 -> vector<4x256xf32>
    %28 = vector.extract_strided_slice %1 {offsets = [3, 0], sizes = [1, 256], strides = [1, 1]} : vector<9x256xf32> to vector<1x256xf32>
    %29 = vector.broadcast %28 : vector<1x256xf32> to vector<4x256xf32>
    %30 = arith.mulf %27, %29 : vector<4x256xf32>
    %c3 = arith.constant 3 : index
    %c0_13 = arith.constant 0 : index
    %c0_14 = arith.constant 0 : index
    %31 = vector.load %arg3[%c3, %c0_13, %c0_14] : memref<9x8x4xf32, #tpu.memory_space<vmem>>, vector<1x8x4xf32>
    %32 = vector.shape_cast %31 : vector<1x8x4xf32> to vector<8x4xf32>
    %cst_15 = arith.constant dense<0.000000e+00> : vector<8x256xf32>
    %33 = tpu.matmul %32, %30, %cst_15 {dimension_numbers = #tpu.dot_dimension_numbers<[1], [0], [0], [1], [0, 0, 1, 1], [], []>} : vector<8x4xf32>, vector<4x256xf32>, vector<8x256xf32> -> vector<8x256xf32>
    %34 = arith.addf %26, %33 : vector<8x256xf32>
    %c4 = arith.constant 4 : index
    %c0_16 = arith.constant 0 : index
    %c0_17 = arith.constant 0 : index
    %35 = vector.load %arg3[%c4, %c0_16, %c0_17] : memref<9x8x4xf32, #tpu.memory_space<vmem>>, vector<1x8x4xf32>
    %36 = vector.shape_cast %35 : vector<1x8x4xf32> to vector<8x4xf32>
    %cst_18 = arith.constant dense<0.000000e+00> : vector<8x256xf32>
    %37 = tpu.matmul %36, %0, %cst_18 {dimension_numbers = #tpu.dot_dimension_numbers<[1], [0], [0], [1], [0, 0, 1, 1], [], []>} : vector<8x4xf32>, vector<4x256xf32>, vector<8x256xf32> -> vector<8x256xf32>
    %38 = arith.addf %34, %37 : vector<8x256xf32>
    %c255_i32 = arith.constant 255 : i32
    %39 = tpu.dynamic_rotate %0 by %c255_i32 dim 1 : vector<4x256xf32>, i32 -> vector<4x256xf32>
    %40 = vector.extract_strided_slice %1 {offsets = [5, 0], sizes = [1, 256], strides = [1, 1]} : vector<9x256xf32> to vector<1x256xf32>
    %41 = vector.broadcast %40 : vector<1x256xf32> to vector<4x256xf32>
    %42 = arith.mulf %39, %41 : vector<4x256xf32>
    %c5 = arith.constant 5 : index
    %c0_19 = arith.constant 0 : index
    %c0_20 = arith.constant 0 : index
    %43 = vector.load %arg3[%c5, %c0_19, %c0_20] : memref<9x8x4xf32, #tpu.memory_space<vmem>>, vector<1x8x4xf32>
    %44 = vector.shape_cast %43 : vector<1x8x4xf32> to vector<8x4xf32>
    %cst_21 = arith.constant dense<0.000000e+00> : vector<8x256xf32>
    %45 = tpu.matmul %44, %42, %cst_21 {dimension_numbers = #tpu.dot_dimension_numbers<[1], [0], [0], [1], [0, 0, 1, 1], [], []>} : vector<8x4xf32>, vector<4x256xf32>, vector<8x256xf32> -> vector<8x256xf32>
    %46 = arith.addf %38, %45 : vector<8x256xf32>
    %c241_i32 = arith.constant 241 : i32
    %47 = tpu.dynamic_rotate %0 by %c241_i32 dim 1 : vector<4x256xf32>, i32 -> vector<4x256xf32>
    %48 = vector.extract_strided_slice %1 {offsets = [6, 0], sizes = [1, 256], strides = [1, 1]} : vector<9x256xf32> to vector<1x256xf32>
    %49 = vector.broadcast %48 : vector<1x256xf32> to vector<4x256xf32>
    %50 = arith.mulf %47, %49 : vector<4x256xf32>
    %c6 = arith.constant 6 : index
    %c0_22 = arith.constant 0 : index
    %c0_23 = arith.constant 0 : index
    %51 = vector.load %arg3[%c6, %c0_22, %c0_23] : memref<9x8x4xf32, #tpu.memory_space<vmem>>, vector<1x8x4xf32>
    %52 = vector.shape_cast %51 : vector<1x8x4xf32> to vector<8x4xf32>
    %cst_24 = arith.constant dense<0.000000e+00> : vector<8x256xf32>
    %53 = tpu.matmul %52, %50, %cst_24 {dimension_numbers = #tpu.dot_dimension_numbers<[1], [0], [0], [1], [0, 0, 1, 1], [], []>} : vector<8x4xf32>, vector<4x256xf32>, vector<8x256xf32> -> vector<8x256xf32>
    %54 = arith.addf %46, %53 : vector<8x256xf32>
    %c240_i32 = arith.constant 240 : i32
    %55 = tpu.dynamic_rotate %0 by %c240_i32 dim 1 : vector<4x256xf32>, i32 -> vector<4x256xf32>
    %56 = vector.extract_strided_slice %1 {offsets = [7, 0], sizes = [1, 256], strides = [1, 1]} : vector<9x256xf32> to vector<1x256xf32>
    %57 = vector.broadcast %56 : vector<1x256xf32> to vector<4x256xf32>
    %58 = arith.mulf %55, %57 : vector<4x256xf32>
    %c7 = arith.constant 7 : index
    %c0_25 = arith.constant 0 : index
    %c0_26 = arith.constant 0 : index
    %59 = vector.load %arg3[%c7, %c0_25, %c0_26] : memref<9x8x4xf32, #tpu.memory_space<vmem>>, vector<1x8x4xf32>
    %60 = vector.shape_cast %59 : vector<1x8x4xf32> to vector<8x4xf32>
    %cst_27 = arith.constant dense<0.000000e+00> : vector<8x256xf32>
    %61 = tpu.matmul %60, %58, %cst_27 {dimension_numbers = #tpu.dot_dimension_numbers<[1], [0], [0], [1], [0, 0, 1, 1], [], []>} : vector<8x4xf32>, vector<4x256xf32>, vector<8x256xf32> -> vector<8x256xf32>
    %62 = arith.addf %54, %61 : vector<8x256xf32>
    %c239_i32 = arith.constant 239 : i32
    %63 = tpu.dynamic_rotate %0 by %c239_i32 dim 1 : vector<4x256xf32>, i32 -> vector<4x256xf32>
    %64 = vector.extract_strided_slice %1 {offsets = [8, 0], sizes = [1, 256], strides = [1, 1]} : vector<9x256xf32> to vector<1x256xf32>
    %65 = vector.broadcast %64 : vector<1x256xf32> to vector<4x256xf32>
    %66 = arith.mulf %63, %65 : vector<4x256xf32>
    %c8 = arith.constant 8 : index
    %c0_28 = arith.constant 0 : index
    %c0_29 = arith.constant 0 : index
    %67 = vector.load %arg3[%c8, %c0_28, %c0_29] : memref<9x8x4xf32, #tpu.memory_space<vmem>>, vector<1x8x4xf32>
    %68 = vector.shape_cast %67 : vector<1x8x4xf32> to vector<8x4xf32>
    %cst_30 = arith.constant dense<0.000000e+00> : vector<8x256xf32>
    %69 = tpu.matmul %68, %66, %cst_30 {dimension_numbers = #tpu.dot_dimension_numbers<[1], [0], [0], [1], [0, 0, 1, 1], [], []>} : vector<8x4xf32>, vector<4x256xf32>, vector<8x256xf32> -> vector<8x256xf32>
    %70 = arith.addf %62, %69 : vector<8x256xf32>
    %c0_31 = arith.constant 0 : index
    %c0_32 = arith.constant 0 : index
    %71 = vector.load %arg4[%c0_31, %c0_32] : memref<8x1xf32, #tpu.memory_space<vmem>>, vector<8x1xf32>
    %72 = vector.broadcast %71 : vector<8x1xf32> to vector<8x256xf32>
    %73 = arith.addf %70, %72 : vector<8x256xf32>
    %cst_33 = arith.constant 0.000000e+00 : f32
    %74 = vector.broadcast %cst_33 : f32 to vector<8x256xf32>
    %75 = arith.maximumf %73, %74 : vector<8x256xf32>
    %cst_34 = arith.constant 0.000000e+00 : f32
    %76 = vector.broadcast %cst_34 : f32 to vector<8x256xf32>
    %c17_i32_35 = arith.constant 17 : i32
    %77 = tpu.dynamic_rotate %75 by %c17_i32_35 dim 1 : vector<8x256xf32>, i32 -> vector<8x256xf32>
    %78 = vector.extract_strided_slice %1 {offsets = [0, 0], sizes = [1, 256], strides = [1, 1]} : vector<9x256xf32> to vector<1x256xf32>
    %79 = vector.broadcast %78 : vector<1x256xf32> to vector<8x256xf32>
    %80 = arith.mulf %77, %79 : vector<8x256xf32>
    %c0_36 = arith.constant 0 : index
    %c0_37 = arith.constant 0 : index
    %c0_38 = arith.constant 0 : index
    %81 = vector.load %arg5[%c0_36, %c0_37, %c0_38] : memref<9x8x8xf32, #tpu.memory_space<vmem>>, vector<1x8x8xf32>
    %82 = vector.shape_cast %81 : vector<1x8x8xf32> to vector<8x8xf32>
    %cst_39 = arith.constant dense<0.000000e+00> : vector<8x256xf32>
    %83 = tpu.matmul %82, %80, %cst_39 {dimension_numbers = #tpu.dot_dimension_numbers<[1], [0], [0], [1], [0, 0, 1, 1], [], []>} : vector<8x8xf32>, vector<8x256xf32>, vector<8x256xf32> -> vector<8x256xf32>
    %84 = arith.addf %76, %83 : vector<8x256xf32>
    %c16_i32_40 = arith.constant 16 : i32
    %85 = tpu.dynamic_rotate %75 by %c16_i32_40 dim 1 : vector<8x256xf32>, i32 -> vector<8x256xf32>
    %86 = vector.extract_strided_slice %1 {offsets = [1, 0], sizes = [1, 256], strides = [1, 1]} : vector<9x256xf32> to vector<1x256xf32>
    %87 = vector.broadcast %86 : vector<1x256xf32> to vector<8x256xf32>
    %88 = arith.mulf %85, %87 : vector<8x256xf32>
    %c1_41 = arith.constant 1 : index
    %c0_42 = arith.constant 0 : index
    %c0_43 = arith.constant 0 : index
    %89 = vector.load %arg5[%c1_41, %c0_42, %c0_43] : memref<9x8x8xf32, #tpu.memory_space<vmem>>, vector<1x8x8xf32>
    %90 = vector.shape_cast %89 : vector<1x8x8xf32> to vector<8x8xf32>
    %cst_44 = arith.constant dense<0.000000e+00> : vector<8x256xf32>
    %91 = tpu.matmul %90, %88, %cst_44 {dimension_numbers = #tpu.dot_dimension_numbers<[1], [0], [0], [1], [0, 0, 1, 1], [], []>} : vector<8x8xf32>, vector<8x256xf32>, vector<8x256xf32> -> vector<8x256xf32>
    %92 = arith.addf %84, %91 : vector<8x256xf32>
    %c15_i32_45 = arith.constant 15 : i32
    %93 = tpu.dynamic_rotate %75 by %c15_i32_45 dim 1 : vector<8x256xf32>, i32 -> vector<8x256xf32>
    %94 = vector.extract_strided_slice %1 {offsets = [2, 0], sizes = [1, 256], strides = [1, 1]} : vector<9x256xf32> to vector<1x256xf32>
    %95 = vector.broadcast %94 : vector<1x256xf32> to vector<8x256xf32>
    %96 = arith.mulf %93, %95 : vector<8x256xf32>
    %c2_46 = arith.constant 2 : index
    %c0_47 = arith.constant 0 : index
    %c0_48 = arith.constant 0 : index
    %97 = vector.load %arg5[%c2_46, %c0_47, %c0_48] : memref<9x8x8xf32, #tpu.memory_space<vmem>>, vector<1x8x8xf32>
    %98 = vector.shape_cast %97 : vector<1x8x8xf32> to vector<8x8xf32>
    %cst_49 = arith.constant dense<0.000000e+00> : vector<8x256xf32>
    %99 = tpu.matmul %98, %96, %cst_49 {dimension_numbers = #tpu.dot_dimension_numbers<[1], [0], [0], [1], [0, 0, 1, 1], [], []>} : vector<8x8xf32>, vector<8x256xf32>, vector<8x256xf32> -> vector<8x256xf32>
    %100 = arith.addf %92, %99 : vector<8x256xf32>
    %c1_i32_50 = arith.constant 1 : i32
    %101 = tpu.dynamic_rotate %75 by %c1_i32_50 dim 1 : vector<8x256xf32>, i32 -> vector<8x256xf32>
    %102 = vector.extract_strided_slice %1 {offsets = [3, 0], sizes = [1, 256], strides = [1, 1]} : vector<9x256xf32> to vector<1x256xf32>
    %103 = vector.broadcast %102 : vector<1x256xf32> to vector<8x256xf32>
    %104 = arith.mulf %101, %103 : vector<8x256xf32>
    %c3_51 = arith.constant 3 : index
    %c0_52 = arith.constant 0 : index
    %c0_53 = arith.constant 0 : index
    %105 = vector.load %arg5[%c3_51, %c0_52, %c0_53] : memref<9x8x8xf32, #tpu.memory_space<vmem>>, vector<1x8x8xf32>
    %106 = vector.shape_cast %105 : vector<1x8x8xf32> to vector<8x8xf32>
    %cst_54 = arith.constant dense<0.000000e+00> : vector<8x256xf32>
    %107 = tpu.matmul %106, %104, %cst_54 {dimension_numbers = #tpu.dot_dimension_numbers<[1], [0], [0], [1], [0, 0, 1, 1], [], []>} : vector<8x8xf32>, vector<8x256xf32>, vector<8x256xf32> -> vector<8x256xf32>
    %108 = arith.addf %100, %107 : vector<8x256xf32>
    %c4_55 = arith.constant 4 : index
    %c0_56 = arith.constant 0 : index
    %c0_57 = arith.constant 0 : index
    %109 = vector.load %arg5[%c4_55, %c0_56, %c0_57] : memref<9x8x8xf32, #tpu.memory_space<vmem>>, vector<1x8x8xf32>
    %110 = vector.shape_cast %109 : vector<1x8x8xf32> to vector<8x8xf32>
    %cst_58 = arith.constant dense<0.000000e+00> : vector<8x256xf32>
    %111 = tpu.matmul %110, %75, %cst_58 {dimension_numbers = #tpu.dot_dimension_numbers<[1], [0], [0], [1], [0, 0, 1, 1], [], []>} : vector<8x8xf32>, vector<8x256xf32>, vector<8x256xf32> -> vector<8x256xf32>
    %112 = arith.addf %108, %111 : vector<8x256xf32>
    %c255_i32_59 = arith.constant 255 : i32
    %113 = tpu.dynamic_rotate %75 by %c255_i32_59 dim 1 : vector<8x256xf32>, i32 -> vector<8x256xf32>
    %114 = vector.extract_strided_slice %1 {offsets = [5, 0], sizes = [1, 256], strides = [1, 1]} : vector<9x256xf32> to vector<1x256xf32>
    %115 = vector.broadcast %114 : vector<1x256xf32> to vector<8x256xf32>
    %116 = arith.mulf %113, %115 : vector<8x256xf32>
    %c5_60 = arith.constant 5 : index
    %c0_61 = arith.constant 0 : index
    %c0_62 = arith.constant 0 : index
    %117 = vector.load %arg5[%c5_60, %c0_61, %c0_62] : memref<9x8x8xf32, #tpu.memory_space<vmem>>, vector<1x8x8xf32>
    %118 = vector.shape_cast %117 : vector<1x8x8xf32> to vector<8x8xf32>
    %cst_63 = arith.constant dense<0.000000e+00> : vector<8x256xf32>
    %119 = tpu.matmul %118, %116, %cst_63 {dimension_numbers = #tpu.dot_dimension_numbers<[1], [0], [0], [1], [0, 0, 1, 1], [], []>} : vector<8x8xf32>, vector<8x256xf32>, vector<8x256xf32> -> vector<8x256xf32>
    %120 = arith.addf %112, %119 : vector<8x256xf32>
    %c241_i32_64 = arith.constant 241 : i32
    %121 = tpu.dynamic_rotate %75 by %c241_i32_64 dim 1 : vector<8x256xf32>, i32 -> vector<8x256xf32>
    %122 = vector.extract_strided_slice %1 {offsets = [6, 0], sizes = [1, 256], strides = [1, 1]} : vector<9x256xf32> to vector<1x256xf32>
    %123 = vector.broadcast %122 : vector<1x256xf32> to vector<8x256xf32>
    %124 = arith.mulf %121, %123 : vector<8x256xf32>
    %c6_65 = arith.constant 6 : index
    %c0_66 = arith.constant 0 : index
    %c0_67 = arith.constant 0 : index
    %125 = vector.load %arg5[%c6_65, %c0_66, %c0_67] : memref<9x8x8xf32, #tpu.memory_space<vmem>>, vector<1x8x8xf32>
    %126 = vector.shape_cast %125 : vector<1x8x8xf32> to vector<8x8xf32>
    %cst_68 = arith.constant dense<0.000000e+00> : vector<8x256xf32>
    %127 = tpu.matmul %126, %124, %cst_68 {dimension_numbers = #tpu.dot_dimension_numbers<[1], [0], [0], [1], [0, 0, 1, 1], [], []>} : vector<8x8xf32>, vector<8x256xf32>, vector<8x256xf32> -> vector<8x256xf32>
    %128 = arith.addf %120, %127 : vector<8x256xf32>
    %c240_i32_69 = arith.constant 240 : i32
    %129 = tpu.dynamic_rotate %75 by %c240_i32_69 dim 1 : vector<8x256xf32>, i32 -> vector<8x256xf32>
    %130 = vector.extract_strided_slice %1 {offsets = [7, 0], sizes = [1, 256], strides = [1, 1]} : vector<9x256xf32> to vector<1x256xf32>
    %131 = vector.broadcast %130 : vector<1x256xf32> to vector<8x256xf32>
    %132 = arith.mulf %129, %131 : vector<8x256xf32>
    %c7_70 = arith.constant 7 : index
    %c0_71 = arith.constant 0 : index
    %c0_72 = arith.constant 0 : index
    %133 = vector.load %arg5[%c7_70, %c0_71, %c0_72] : memref<9x8x8xf32, #tpu.memory_space<vmem>>, vector<1x8x8xf32>
    %134 = vector.shape_cast %133 : vector<1x8x8xf32> to vector<8x8xf32>
    %cst_73 = arith.constant dense<0.000000e+00> : vector<8x256xf32>
    %135 = tpu.matmul %134, %132, %cst_73 {dimension_numbers = #tpu.dot_dimension_numbers<[1], [0], [0], [1], [0, 0, 1, 1], [], []>} : vector<8x8xf32>, vector<8x256xf32>, vector<8x256xf32> -> vector<8x256xf32>
    %136 = arith.addf %128, %135 : vector<8x256xf32>
    %c239_i32_74 = arith.constant 239 : i32
    %137 = tpu.dynamic_rotate %75 by %c239_i32_74 dim 1 : vector<8x256xf32>, i32 -> vector<8x256xf32>
    %138 = vector.extract_strided_slice %1 {offsets = [8, 0], sizes = [1, 256], strides = [1, 1]} : vector<9x256xf32> to vector<1x256xf32>
    %139 = vector.broadcast %138 : vector<1x256xf32> to vector<8x256xf32>
    %140 = arith.mulf %137, %139 : vector<8x256xf32>
    %c8_75 = arith.constant 8 : index
    %c0_76 = arith.constant 0 : index
    %c0_77 = arith.constant 0 : index
    %141 = vector.load %arg5[%c8_75, %c0_76, %c0_77] : memref<9x8x8xf32, #tpu.memory_space<vmem>>, vector<1x8x8xf32>
    %142 = vector.shape_cast %141 : vector<1x8x8xf32> to vector<8x8xf32>
    %cst_78 = arith.constant dense<0.000000e+00> : vector<8x256xf32>
    %143 = tpu.matmul %142, %140, %cst_78 {dimension_numbers = #tpu.dot_dimension_numbers<[1], [0], [0], [1], [0, 0, 1, 1], [], []>} : vector<8x8xf32>, vector<8x256xf32>, vector<8x256xf32> -> vector<8x256xf32>
    %144 = arith.addf %136, %143 : vector<8x256xf32>
    %c0_79 = arith.constant 0 : index
    %c0_80 = arith.constant 0 : index
    %145 = vector.load %arg6[%c0_79, %c0_80] : memref<8x1xf32, #tpu.memory_space<vmem>>, vector<8x1xf32>
    %146 = vector.broadcast %145 : vector<8x1xf32> to vector<8x256xf32>
    %147 = arith.addf %144, %146 : vector<8x256xf32>
    %c0_81 = arith.constant 0 : index
    %c0_82 = arith.constant 0 : index
    %148 = vector.load %arg7[%c0_81, %c0_82] : memref<8x4xf32, #tpu.memory_space<vmem>>, vector<8x4xf32>
    %cst_83 = arith.constant dense<0.000000e+00> : vector<8x256xf32>
    %149 = tpu.matmul %148, %0, %cst_83 {dimension_numbers = #tpu.dot_dimension_numbers<[1], [0], [0], [1], [0, 0, 1, 1], [], []>} : vector<8x4xf32>, vector<4x256xf32>, vector<8x256xf32> -> vector<8x256xf32>
    %150 = arith.addf %147, %149 : vector<8x256xf32>
    %c0_84 = arith.constant 0 : index
    %c0_85 = arith.constant 0 : index
    %151 = vector.load %arg8[%c0_84, %c0_85] : memref<8x1xf32, #tpu.memory_space<vmem>>, vector<8x1xf32>
    %152 = vector.broadcast %151 : vector<8x1xf32> to vector<8x256xf32>
    %153 = arith.addf %150, %152 : vector<8x256xf32>
    %c0_86 = arith.constant 0 : index
    %c0_87 = arith.constant 0 : index
    %154 = vector.load %arg9[%c0_86, %c0_87] : memref<8x256xf32, #tpu.memory_space<vmem>>, vector<8x256xf32>
    tpu.vector_store %arg9[%c0_86, %c0_87], %153 {strides = array<i32>} : memref<8x256xf32, #tpu.memory_space<vmem>>, vector<8x256xf32>,
    return
  }
  func.func @transform_0(%arg0: i32) -> (i32, i32) {
    %c0_i32 = arith.constant 0 : i32
    %c0_i32_0 = arith.constant 0 : i32
    return %c0_i32, %arg0 : i32, i32
  }
  func.func @transform_1(%arg0: i32) -> (i32, i32) {
    %c0_i32 = arith.constant 0 : i32
    %c0_i32_0 = arith.constant 0 : i32
    %c0_i32_1 = arith.constant 0 : i32
    return %c0_i32, %c0_i32_0 : i32, i32
  }
  func.func @transform_2(%arg0: i32) -> (i32, i32, i32) {
    %c0_i32 = arith.constant 0 : i32
    %c0_i32_0 = arith.constant 0 : i32
    %c0_i32_1 = arith.constant 0 : i32
    %c0_i32_2 = arith.constant 0 : i32
    return %c0_i32, %c0_i32_0, %c0_i32_1 : i32, i32, i32
  }
  func.func @transform_3(%arg0: i32) -> (i32, i32) {
    %c0_i32 = arith.constant 0 : i32
    %c0_i32_0 = arith.constant 0 : i32
    %c0_i32_1 = arith.constant 0 : i32
    return %c0_i32, %c0_i32_0 : i32, i32
  }
  func.func @transform_4(%arg0: i32) -> (i32, i32, i32) {
    %c0_i32 = arith.constant 0 : i32
    %c0_i32_0 = arith.constant 0 : i32
    %c0_i32_1 = arith.constant 0 : i32
    %c0_i32_2 = arith.constant 0 : i32
    return %c0_i32, %c0_i32_0, %c0_i32_1 : i32, i32, i32
  }
  func.func @transform_5(%arg0: i32) -> (i32, i32) {
    %c0_i32 = arith.constant 0 : i32
    %c0_i32_0 = arith.constant 0 : i32
    %c0_i32_1 = arith.constant 0 : i32
    return %c0_i32, %c0_i32_0 : i32, i32
  }
  func.func @transform_6(%arg0: i32) -> (i32, i32) {
    %c0_i32 = arith.constant 0 : i32
    %c0_i32_0 = arith.constant 0 : i32
    %c0_i32_1 = arith.constant 0 : i32
    return %c0_i32, %c0_i32_0 : i32, i32
  }
  func.func @transform_7(%arg0: i32) -> (i32, i32) {
    %c0_i32 = arith.constant 0 : i32
    %c0_i32_0 = arith.constant 0 : i32
    %c0_i32_1 = arith.constant 0 : i32
    return %c0_i32, %c0_i32_0 : i32, i32
  }
  func.func @transform_8(%arg0: i32) -> (i32, i32) {
    %c0_i32 = arith.constant 0 : i32
    %c0_i32_0 = arith.constant 0 : i32
    return %c0_i32, %arg0 : i32, i32
  }
}

</mosaic_0001>

<llo_original>
// kernel: tpu_custom_call.1
$region0: #{tpu_custom_call.1}
  #allocation0 [shape = 'u32[]', space=smem, size = 0x4, offset = 0x4, fixed_abs, tag = 'smem constant byte address 0x4 - core index']
  #allocation1 [shape = 'u32[144,128]{1,0:T(1,128)}', space=vmem, size = 0x12000, scoped, tag = 'internal scratch']
  %s0 = inlined_call_operand.vmem [shape: f32[4,512], index: 0, kind: input, shape index: {}]
  %s1 = inlined_call_operand.vmem [shape: f32[9,256], index: 1, kind: input, shape index: {}]
  %s2 = inlined_call_operand.vmem [shape: f32[9,8,4], index: 2, kind: input, shape index: {}]
  %s3 = inlined_call_operand.vmem [shape: f32[8,1], index: 3, kind: input, shape index: {}]
  %s4 = inlined_call_operand.vmem [shape: f32[9,8,8], index: 4, kind: input, shape index: {}]
  %s5 = inlined_call_operand.vmem [shape: f32[8,1], index: 5, kind: input, shape index: {}]
  %s6 = inlined_call_operand.vmem [shape: f32[8,4], index: 6, kind: input, shape index: {}]
  %s7 = inlined_call_operand.vmem [shape: f32[8,1], index: 7, kind: input, shape index: {}]
  %s8 = inlined_call_operand.hbm [shape: f32[8,512], index: 8, kind: output, shape index: {}]
  %s9 = sld [smem:[#allocation0]]
  $region65: #{tpu_custom_call.1} parent=0
    _
  %s11 = ssub.s32 1, %s9
  %s12 = scalar_select 0, %s11, %s9
  $region1: #{tpu_custom_call.1} parent=0
    #allocation2 [shape = 'u8[16384]{0}', space=vmem, size = 0x4000, scoped, tag = 'output window, operand 0']
    #allocation3 [shape = 's32[2]{0}', space=sflag, size = 0x8, scoped, tag = 'scoped memory for tpu_custom_call.1']
    %13 = vsyncpa [#allocation3], 0
    %s14 = scalar_lea.sflag [#allocation3], 1
    %15 = vsyncpa %s14, 0
    loop: start=0, step=1, limit=4
    $region2: #{tpu_custom_call.1} parent=1 // loop_pre_header
      _
    $region3: #{tpu_custom_call.1} parent=1 // loop_header
      %s17 = sphi 0, %s21
      %p18 = scmp.ge.s32.totalorder %s17, 4
      %s27 = sphi 0, %s29
      %s30 = sphi 0, %s27
      %s31 = sphi 0, %s30
      %s47 = sphi 0, %s31
      %s51 = sphi 0, %s51
      %s53 = sphi 0, %s51
      %s54 = sphi 0, %s53
      %s68 = sphi 0, %s54
      %s72 = sphi 0, %s72
      %s74 = sphi 0, %s72
      %s75 = sphi 0, %s74
      %s89 = sphi 0, %s75
      %s93 = sphi 0, %s93
      %s95 = sphi 0, %s93
      %s96 = sphi 0, %s95
      %s110 = sphi 0, %s96
      %s114 = sphi 0, %s114
      %s116 = sphi 0, %s114
      %s117 = sphi 0, %s116
      %s131 = sphi 0, %s117
      %s135 = sphi 0, %s135
      %s137 = sphi 0, %s135
      %s138 = sphi 0, %s137
      %s152 = sphi 0, %s138
      %s156 = sphi 0, %s156
      %s158 = sphi 0, %s156
      %s159 = sphi 0, %s158
      %s173 = sphi 0, %s159
      %s177 = sphi 0, %s177
      %s179 = sphi 0, %s177
      %s180 = sphi 0, %s179
      %s194 = sphi 0, %s180
      %s200 = sphi 0, %s202
      %s203 = sphi 0, %s200
      %s204 = sphi 0, %s203
      %s220 = sphi 0, %s204
    $region4: #{tpu_custom_call.1} parent=1 // loop_header_branch
      %20 = sbr.rel (%p18) target = $region8
    $region5: #{tpu_custom_call.1} parent=1 // loop_body
      %s22 = ssub.s32 %s17, 1
      %s23 = ssub.s32 %s17, 2
      %s24 = sadd.s32 %s17, 1
      %s25 = ssub.s32 %s17, %s24
      %p26 = scmp.eq.s32.totalorder %s25, 0
      %s28 = sadd.s32 %s27, 1
      %s29 = scalar_select %p26, %s27, %s28
      %p32 = pneg %p26
      %p33 = scmp.eq.s32.totalorder %s17, 1
      %p34 = por %p32, %p33
      %p35 = scmp.ne.s32.totalorder %s27, %s30
      %p36 = scmp.eq.s32.totalorder %s17, 0
      %p37 = por %p35, %p36
      %p38 = scmp.ne.s32.totalorder %s27, %s30
      %p39 = scmp.eq.s32.totalorder %s22, 1
      %p40 = por %p38, %p39
      %p41 = scmp.ne.s32.totalorder %s30, %s31
      %p42 = scmp.eq.s32.totalorder %s22, 0
      %p43 = por %p41, %p42
      %p44 = scmp.ne.s32.totalorder %s30, %s31
      %p45 = scmp.eq.s32.totalorder %s23, 1
      %p46 = por %p44, %p45
      %p48 = scmp.ne.s32.totalorder %s31, %s47
      %p49 = scmp.eq.s32.totalorder %s23, 0
      %p50 = por %p48, %p49
      %s52 = sadd.s32 %s51, 1
      %p55 = scmp.eq.s32.totalorder %s17, 1
      %p56 = scmp.ne.s32.totalorder %s51, %s53
      %p57 = scmp.eq.s32.totalorder %s17, 0
      %p58 = por %p56, %p57
      %p59 = scmp.ne.s32.totalorder %s51, %s53
      %p60 = scmp.eq.s32.totalorder %s22, 1
      %p61 = por %p59, %p60
      %p62 = scmp.ne.s32.totalorder %s53, %s54
      %p63 = scmp.eq.s32.totalorder %s22, 0
      %p64 = por %p62, %p63
      %p65 = scmp.ne.s32.totalorder %s53, %s54
      %p66 = scmp.eq.s32.totalorder %s23, 1
      %p67 = por %p65, %p66
      %p69 = scmp.ne.s32.totalorder %s54, %s68
      %p70 = scmp.eq.s32.totalorder %s23, 0
      %p71 = por %p69, %p70
      %s73 = sadd.s32 %s72, 1
      %p76 = scmp.eq.s32.totalorder %s17, 1
      %p77 = scmp.ne.s32.totalorder %s72, %s74
      %p78 = scmp.eq.s32.totalorder %s17, 0
      %p79 = por %p77, %p78
      %p80 = scmp.ne.s32.totalorder %s72, %s74
      %p81 = scmp.eq.s32.totalorder %s22, 1
      %p82 = por %p80, %p81
      %p83 = scmp.ne.s32.totalorder %s74, %s75
      %p84 = scmp.eq.s32.totalorder %s22, 0
      %p85 = por %p83, %p84
      %p86 = scmp.ne.s32.totalorder %s74, %s75
      %p87 = scmp.eq.s32.totalorder %s23, 1
      %p88 = por %p86, %p87
      %p90 = scmp.ne.s32.totalorder %s75, %s89
      %p91 = scmp.eq.s32.totalorder %s23, 0
      %p92 = por %p90, %p91
      %s94 = sadd.s32 %s93, 1
      %p97 = scmp.eq.s32.totalorder %s17, 1
      %p98 = scmp.ne.s32.totalorder %s93, %s95
      %p99 = scmp.eq.s32.totalorder %s17, 0
      %p100 = por %p98, %p99
      %p101 = scmp.ne.s32.totalorder %s93, %s95
      %p102 = scmp.eq.s32.totalorder %s22, 1
      %p103 = por %p101, %p102
      %p104 = scmp.ne.s32.totalorder %s95, %s96
      %p105 = scmp.eq.s32.totalorder %s22, 0
      %p106 = por %p104, %p105
      %p107 = scmp.ne.s32.totalorder %s95, %s96
      %p108 = scmp.eq.s32.totalorder %s23, 1
      %p109 = por %p107, %p108
      %p111 = scmp.ne.s32.totalorder %s96, %s110
      %p112 = scmp.eq.s32.totalorder %s23, 0
      %p113 = por %p111, %p112
      %s115 = sadd.s32 %s114, 1
      %p118 = scmp.eq.s32.totalorder %s17, 1
      %p119 = scmp.ne.s32.totalorder %s114, %s116
      %p120 = scmp.eq.s32.totalorder %s17, 0
      %p121 = por %p119, %p120
      %p122 = scmp.ne.s32.totalorder %s114, %s116
      %p123 = scmp.eq.s32.totalorder %s22, 1
      %p124 = por %p122, %p123
      %p125 = scmp.ne.s32.totalorder %s116, %s117
      %p126 = scmp.eq.s32.totalorder %s22, 0
      %p127 = por %p125, %p126
      %p128 = scmp.ne.s32.totalorder %s116, %s117
      %p129 = scmp.eq.s32.totalorder %s23, 1
      %p130 = por %p128, %p129
      %p132 = scmp.ne.s32.totalorder %s117, %s131
      %p133 = scmp.eq.s32.totalorder %s23, 0
      %p134 = por %p132, %p133
      %s136 = sadd.s32 %s135, 1
      %p139 = scmp.eq.s32.totalorder %s17, 1
      %p140 = scmp.ne.s32.totalorder %s135, %s137
      %p141 = scmp.eq.s32.totalorder %s17, 0
      %p142 = por %p140, %p141
      %p143 = scmp.ne.s32.totalorder %s135, %s137
      %p144 = scmp.eq.s32.totalorder %s22, 1
      %p145 = por %p143, %p144
      %p146 = scmp.ne.s32.totalorder %s137, %s138
      %p147 = scmp.eq.s32.totalorder %s22, 0
      %p148 = por %p146, %p147
      %p149 = scmp.ne.s32.totalorder %s137, %s138
      %p150 = scmp.eq.s32.totalorder %s23, 1
      %p151 = por %p149, %p150
      %p153 = scmp.ne.s32.totalorder %s138, %s152
      %p154 = scmp.eq.s32.totalorder %s23, 0
      %p155 = por %p153, %p154
      %s157 = sadd.s32 %s156, 1
      %p160 = scmp.eq.s32.totalorder %s17, 1
      %p161 = scmp.ne.s32.totalorder %s156, %s158
      %p162 = scmp.eq.s32.totalorder %s17, 0
      %p163 = por %p161, %p162
      %p164 = scmp.ne.s32.totalorder %s156, %s158
      %p165 = scmp.eq.s32.totalorder %s22, 1
      %p166 = por %p164, %p165
      %p167 = scmp.ne.s32.totalorder %s158, %s159
      %p168 = scmp.eq.s32.totalorder %s22, 0
      %p169 = por %p167, %p168
      %p170 = scmp.ne.s32.totalorder %s158, %s159
      %p171 = scmp.eq.s32.totalorder %s23, 1
      %p172 = por %p170, %p171
      %p174 = scmp.ne.s32.totalorder %s159, %s173
      %p175 = scmp.eq.s32.totalorder %s23, 0
      %p176 = por %p174, %p175
      %s178 = sadd.s32 %s177, 1
      %p181 = scmp.eq.s32.totalorder %s17, 1
      %p182 = scmp.ne.s32.totalorder %s177, %s179
      %p183 = scmp.eq.s32.totalorder %s17, 0
      %p184 = por %p182, %p183
      %p185 = scmp.ne.s32.totalorder %s177, %s179
      %p186 = scmp.eq.s32.totalorder %s22, 1
      %p187 = por %p185, %p186
      %p188 = scmp.ne.s32.totalorder %s179, %s180
      %p189 = scmp.eq.s32.totalorder %s22, 0
      %p190 = por %p188, %p189
      %p191 = scmp.ne.s32.totalorder %s179, %s180
      %p192 = scmp.eq.s32.totalorder %s23, 1
      %p193 = por %p191, %p192
      %p195 = scmp.ne.s32.totalorder %s180, %s194
      %p196 = scmp.eq.s32.totalorder %s23, 0
      %p197 = por %p195, %p196
      %s198 = ssub.s32 %s17, %s24
      %p199 = scmp.eq.s32.totalorder %s198, 0
      %s201 = sadd.s32 %s200, 1
      %s202 = scalar_select %p199, %s200, %s201
      %p205 = pneg %p199
      %p206 = scmp.eq.s32.totalorder %s17, 1
      %p207 = por %p205, %p206
      %p208 = scmp.ne.s32.totalorder %s200, %s203
      %p209 = scmp.eq.s32.totalorder %s17, 0
      %p210 = por %p208, %p209
      %p211 = scmp.ne.s32.totalorder %s200, %s203
      %p212 = scmp.eq.s32.totalorder %s22, 1
      %p213 = por %p211, %p212
      %p214 = scmp.ne.s32.totalorder %s203, %s204
      %p215 = scmp.eq.s32.totalorder %s22, 0
      %p216 = por %p214, %p215
      %p217 = scmp.ne.s32.totalorder %s203, %s204
      %p218 = scmp.eq.s32.totalorder %s23, 1
      %p219 = por %p217, %p218
      %p221 = scmp.ne.s32.totalorder %s204, %s220
      %p222 = scmp.eq.s32.totalorder %s23, 0
      %p223 = por %p221, %p222
      %p224 = scmp.le.s32.totalorder 1, %s17
      %p225 = scmp.lt.s32.totalorder %s17, 3
      %p226 = pnand %p224, %p225
      %p227 = pneg %p226
      // Predicated region
      $region9: #{tpu_custom_call.1} parent=5 // pred_check
        _
      $region10: #{tpu_custom_call.1} parent=5 // pred_check_branch
        %229 = sbr.rel (%p226) target = $region12
      $region11: #{tpu_custom_call.1} parent=5 // pred_region
        %s230 = ssub.s32 %s17, 1
        // Predicated region
        $region13: #{tpu_custom_call.1} parent=11 // pred_check
          %p231 = pneg %p64
        $region14: #{tpu_custom_call.1} parent=11 // pred_check_branch
          %233 = sbr.rel (%p231) target = $region16
        $region15: #{tpu_custom_call.1} parent=11 // pred_region
          _
        $region16: #{tpu_custom_call.1} parent=11 // pred_fallthru
          _
        // Predicated region
        $region17: #{tpu_custom_call.1} parent=11 // pred_check
          %p234 = pneg %p85
        $region18: #{tpu_custom_call.1} parent=11 // pred_check_branch
          %236 = sbr.rel (%p234) target = $region20
        $region19: #{tpu_custom_call.1} parent=11 // pred_region
          _
        $region20: #{tpu_custom_call.1} parent=11 // pred_fallthru
          _
        // Predicated region
        $region21: #{tpu_custom_call.1} parent=11 // pred_check
          %p237 = pneg %p106
        $region22: #{tpu_custom_call.1} parent=11 // pred_check_branch
          %239 = sbr.rel (%p237) target = $region24
        $region23: #{tpu_custom_call.1} parent=11 // pred_region
          _
        $region24: #{tpu_custom_call.1} parent=11 // pred_fallthru
          _
        // Predicated region
        $region25: #{tpu_custom_call.1} parent=11 // pred_check
          %p240 = pneg %p127
        $region26: #{tpu_custom_call.1} parent=11 // pred_check_branch
          %242 = sbr.rel (%p240) target = $region28
        $region27: #{tpu_custom_call.1} parent=11 // pred_region
          _
        $region28: #{tpu_custom_call.1} parent=11 // pred_fallthru
          _
        // Predicated region
        $region29: #{tpu_custom_call.1} parent=11 // pred_check
          %p243 = pneg %p148
        $region30: #{tpu_custom_call.1} parent=11 // pred_check_branch
          %245 = sbr.rel (%p243) target = $region32
        $region31: #{tpu_custom_call.1} parent=11 // pred_region
          _
        $region32: #{tpu_custom_call.1} parent=11 // pred_fallthru
          _
        // Predicated region
        $region33: #{tpu_custom_call.1} parent=11 // pred_check
          %p246 = pneg %p169
        $region34: #{tpu_custom_call.1} parent=11 // pred_check_branch
          %248 = sbr.rel (%p246) target = $region36
        $region35: #{tpu_custom_call.1} parent=11 // pred_region
          _
        $region36: #{tpu_custom_call.1} parent=11 // pred_fallthru
          _
        // Predicated region
        $region37: #{tpu_custom_call.1} parent=11 // pred_check
          %p249 = pneg %p190
        $region38: #{tpu_custom_call.1} parent=11 // pred_check_branch
          %251 = sbr.rel (%p249) target = $region40
        $region39: #{tpu_custom_call.1} parent=11 // pred_region
          _
        $region40: #{tpu_custom_call.1} parent=11 // pred_fallthru
          _
      $region12: #{tpu_custom_call.1} parent=5 // pred_fallthru
        _
      %p252 = scmp.lt.s32.totalorder %s17, 2
      // Predicated region
      $region41: #{tpu_custom_call.1} parent=5 // pred_check
        %p253 = pneg %p252
      $region42: #{tpu_custom_call.1} parent=5 // pred_check_branch
        %255 = sbr.rel (%p253) target = $region44
      $region43: #{tpu_custom_call.1} parent=5 // pred_region
        // Predicated region
        $region45: #{tpu_custom_call.1} parent=43 // pred_check
          %p256 = pneg %p37
        $region46: #{tpu_custom_call.1} parent=43 // pred_check_branch
          %258 = sbr.rel (%p256) target = $region48
        $region47: #{tpu_custom_call.1} parent=43 // pred_region
          %s259 = smul.u32 2, %s17
          %p260 = scmp.lt.s32.totalorder %s259, 3
          %s261 = scalar_select %p260, %s259, 3
          %s262 = smul.addr %s261, 4
          %s263 = scalar_lea.vmem %s0, %s262
          %s264 = smul.u32 2, %s17
        $region48: #{tpu_custom_call.1} parent=43 // pred_fallthru
          _
      $region44: #{tpu_custom_call.1} parent=5 // pred_fallthru
        _
      %p265 = scmp.le.s32.totalorder 1, %s17
      %p266 = scmp.lt.s32.totalorder %s17, 3
      %p267 = pnand %p265, %p266
      %p268 = pneg %p267
      // Predicated region
      $region49: #{tpu_custom_call.1} parent=5 // pred_check
        _
      $region50: #{tpu_custom_call.1} parent=5 // pred_check_branch
        %270 = sbr.rel (%p267) target = $region52
      $region51: #{tpu_custom_call.1} parent=5 // pred_region
        %s271 = ssub.s32 %s17, 1
        %s272 = smul.u32 2, %s22
        %p273 = scmp.lt.s32.totalorder %s272, 3
        %s274 = scalar_select %p273, %s272, 3
        %s275 = smul.addr %s274, 4
        %s276 = scalar_lea.vmem %s0, %s275
        %p277 = pneg %p43
        %p278 = pneg %p40
        %p279 = pneg %p64
        %p280 = pneg %p61
        %p281 = pneg %p85
        %p282 = pneg %p82
        %p283 = pneg %p106
        %p284 = pneg %p103
        %p285 = pneg %p127
        %p286 = pneg %p124
        %p287 = pneg %p148
        %p288 = pneg %p145
        %p289 = pneg %p169
        %p290 = pneg %p166
        %p291 = pneg %p190
        %p292 = pneg %p187
        %p293 = pneg %p216
        %p294 = pneg %p213
        %s295 = sand.u32 %s203, 1
        %s296 = scalar_lea.sflag [#allocation3], %s295
        %s297 = sand.u32 %s203, 1
        %s298 = smul.addr %s297, 16
        %s299 = scalar_lea.vmem [#allocation2], %s298
        %s300 = smul.u32 2, %s22
        %p301 = scmp.lt.s32.totalorder %s300, 3
        %s302 = scalar_select %p301, %s300, 3
        %s303 = smul.addr %s302, 4
        %s304 = scalar_lea.vmem %s0, %s303
        %s305 = smul.u32 2, %s22
        %s306 = smul.u32 2, %s22
        %v307 = vld [vmem:[%s304] sm:$0xff]
        %v308 = vld [vmem:[%s1] sm:$0xff]
        %v309 = vld [vmem:[%s1 + $0x8] sm:$0xff]
        %v310 = vld [vmem:[%s1 + $0x10] sm:$0x1]
        %v311 = vld [vmem:[%s1 + $0x18] sm:$0x1]
        %v313 = vcombine.high %v307, %v307
        %315 = vrot.lane.b32.xlu0 %v307, 17
        %v316 = vpop.permute.xlu0 %315
        %317 = vrot.lane.b32.xlu0 %v313, 17
        %v318 = vpop.permute.xlu0 %317
        %v319 = vlaneseq
        %v320 = vand.u32 %v319, 127
        %vm321 = vcmp.lt.s32.totalorder %v320, 17
        %v322 = vsel %vm321, %v316, %v318
        %v323 = vsel %vm321, %v318, %v316
        %v324 = vlaneseq
        %v325 = vshrl.u32 %v324, 7
        %v326 = vsub.s32 0, %v325
        %v327 = vrot.slane %v308, %v326
        %v328 = vlaneseq
        %v329 = vshrl.u32 %v328, 7
        %v330 = vsub.s32 0, %v329
        %v331 = vrot.slane %v309, %v330
        %v332 = vmul.f32 %v323, %v327
        %v333 = vmul.f32 %v322, %v331
        %v334 = vld [vmem:[%s2] sm:$0xff]
        %335 = vrot.lane.b32.xlu0 %v307, 16
        %v336 = vpop.permute.xlu0 %335
        %337 = vrot.lane.b32.xlu0 %v313, 16
        %v338 = vpop.permute.xlu0 %337
        %vm339 = vcmp.lt.s32.totalorder %v320, 16
        %v340 = vsel %vm339, %v336, %v338
        %v341 = vsel %vm339, %v338, %v336
        %v342 = vlaneseq
        %v343 = vshrl.u32 %v342, 7
        %v344 = vsub.s32 1, %v343
        %v345 = vrot.slane %v308, %v344
        %v346 = vlaneseq
        %v347 = vshrl.u32 %v346, 7
        %v348 = vsub.s32 1, %v347
        %v349 = vrot.slane %v309, %v348
        %v350 = vmul.f32 %v341, %v345
        %v351 = vmul.f32 %v340, %v349
        %s352 = scalar_lea.vmem %s2, 8
        %v353 = vld [vmem:[%s352] sm:$0xff]
        %vm354 = vcmask 31744
        %v356 = vsel %vm354, %v353, 0
        %vm358 = vcmask 1043456
        %v360 = vsel %vm358, %v350, 0
        %v363 = vsel %vm358, %v351, 0
        %365 = vmatprep.subr.mxu0 0.0
        %366 = vmatpush1.msra.mxu0 0.0
        %367 = vmatprep.subr.mxu0 0.0
        %368 = vmatpush1.msra.mxu0 0.0
        %369 = vmatprep.subr.mxu0 0.0
        %370 = vmatpush1.msra.mxu0 0.0
        %371 = vmatprep.subr.mxu0 0.0
        %372 = vmatpush1.msra.mxu0 0.0
        %373 = vmatprep.subr.mxu0 0.0
        %374 = vmatpush1.msra.mxu0 0.0
        %375 = vmatprep.subr.mxu0 0.0
        %376 = vmatpush1.msra.mxu0 0.0
        %377 = vmatprep.subr.mxu0 0.0
        %378 = vmatpush1.msra.mxu0 0.0
        %379 = vmatprep.subr.mxu0 0.0
        %380 = vmatpush1.msra.mxu0 0.0
        %381 = vmatprep.subr.mxu0 0.0
        %382 = vmatpush1.msra.mxu0 0.0
        %383 = vmatprep.subr.mxu0 0.0
        %384 = vmatpush1.msra.mxu0 0.0
        %385 = vmatprep.subr.mxu0 0.0
        %386 = vmatpush1.msra.mxu0 0.0
        %387 = vmatprep.subr.mxu0 0.0
        %388 = vmatpush1.msra.mxu0 0.0
        %389 = vmatprep.subr.mxu0 0.0
        %390 = vmatpush1.msra.mxu0 0.0
        %391 = vmatprep.subr.mxu0 0.0
        %392 = vmatpush1.msra.mxu0 0.0
        %393 = vmatprep.subr.mxu0 0.0
        %394 = vmatpush1.msra.mxu0 0.0
        %395 = vmatprep.subr.mxu0 %v363
        %396 = vmatpush1.msra.mxu0 %v360
        %397 = vmatprep.subr.mxu0 0.0
        %398 = vmatpush2.msra.mxu0 0.0
        %399 = vmatprep.subr.mxu0 0.0
        %400 = vmatpush2.msra.mxu0 0.0
        %401 = vmatprep.subr.mxu0 0.0
        %402 = vmatpush2.msra.mxu0 0.0
        %403 = vmatprep.subr.mxu0 0.0
        %404 = vmatpush2.msra.mxu0 0.0
        %405 = vmatprep.subr.mxu0 0.0
        %406 = vmatpush2.msra.mxu0 0.0
        %407 = vmatprep.subr.mxu0 0.0
        %408 = vmatpush2.msra.mxu0 0.0
        %409 = vmatprep.subr.mxu0 0.0
        %410 = vmatpush2.msra.mxu0 0.0
        %411 = vmatprep.subr.mxu0 0.0
        %412 = vmatpush2.msra.mxu0 0.0
        %413 = vmatprep.subr.mxu0 0.0
        %414 = vmatpush2.msra.mxu0 0.0
        %415 = vmatprep.subr.mxu0 0.0
        %416 = vmatpush2.msra.mxu0 0.0
        %417 = vmatprep.subr.mxu0 0.0
        %418 = vmatpush2.msra.mxu0 0.0
        %419 = vmatprep.subr.mxu0 0.0
        %420 = vmatpush2.msra.mxu0 0.0
        %421 = vmatprep.subr.mxu0 0.0
        %422 = vmatpush2.msra.mxu0 0.0
        %423 = vmatprep.subr.mxu0 0.0
        %424 = vmatpush2.msra.mxu0 0.0
        %425 = vmatprep.subr.mxu0 0.0
        %426 = vmatpush2.msra.mxu0 0.0
        %427 = vmatprep.subr.mxu0 0.0
        %428 = vmatpush2.msra.mxu0 0.0
        %429 = vmatprep.mubr.f32.mxu0 0.0
        %430 = vmatmul.mubr.f32.gmra.mxu0 %v356
        %v431 = vpop.f32.mrf.mxu0
        %v432 = vadd.f32 0.0, %v431
        %v433 = vpop.f32.mrf.mxu0
        %v434 = vadd.f32 0.0, %v433
        %435 = vdwg.mxu0
        %v437 = vsel %vm354, %v334, 0
        %v440 = vsel %vm358, %v332, 0
        %v443 = vsel %vm358, %v333, 0
        %445 = vmatprep.subr.mxu0 0.0
        %446 = vmatpush1.msra.mxu0 0.0
        %447 = vmatprep.subr.mxu0 0.0
        %448 = vmatpush1.msra.mxu0 0.0
        %449 = vmatprep.subr.mxu0 0.0
        %450 = vmatpush1.msra.mxu0 0.0
        %451 = vmatprep.subr.mxu0 0.0
        %452 = vmatpush1.msra.mxu0 0.0
        %453 = vmatprep.subr.mxu0 0.0
        %454 = vmatpush1.msra.mxu0 0.0
        %455 = vmatprep.subr.mxu0 0.0
        %456 = vmatpush1.msra.mxu0 0.0
        %457 = vmatprep.subr.mxu0 0.0
        %458 = vmatpush1.msra.mxu0 0.0
        %459 = vmatprep.subr.mxu0 0.0
        %460 = vmatpush1.msra.mxu0 0.0
        %461 = vmatprep.subr.mxu0 0.0
        %462 = vmatpush1.msra.mxu0 0.0
        %463 = vmatprep.subr.mxu0 0.0
        %464 = vmatpush1.msra.mxu0 0.0
        %465 = vmatprep.subr.mxu0 0.0
        %466 = vmatpush1.msra.mxu0 0.0
        %467 = vmatprep.subr.mxu0 0.0
        %468 = vmatpush1.msra.mxu0 0.0
        %469 = vmatprep.subr.mxu0 0.0
        %470 = vmatpush1.msra.mxu0 0.0
        %471 = vmatprep.subr.mxu0 0.0
        %472 = vmatpush1.msra.mxu0 0.0
        %473 = vmatprep.subr.mxu0 0.0
        %474 = vmatpush1.msra.mxu0 0.0
        %475 = vmatprep.subr.mxu0 %v443
        %476 = vmatpush1.msra.mxu0 %v440
        %477 = vmatprep.subr.mxu0 0.0
        %478 = vmatpush2.msra.mxu0 0.0
        %479 = vmatprep.subr.mxu0 0.0
        %480 = vmatpush2.msra.mxu0 0.0
        %481 = vmatprep.subr.mxu0 0.0
        %482 = vmatpush2.msra.mxu0 0.0
        %483 = vmatprep.subr.mxu0 0.0
        %484 = vmatpush2.msra.mxu0 0.0
        %485 = vmatprep.subr.mxu0 0.0
        %486 = vmatpush2.msra.mxu0 0.0
        %487 = vmatprep.subr.mxu0 0.0
        %488 = vmatpush2.msra.mxu0 0.0
        %489 = vmatprep.subr.mxu0 0.0
        %490 = vmatpush2.msra.mxu0 0.0
        %491 = vmatprep.subr.mxu0 0.0
        %492 = vmatpush2.msra.mxu0 0.0
        %493 = vmatprep.subr.mxu0 0.0
        %494 = vmatpush2.msra.mxu0 0.0
        %495 = vmatprep.subr.mxu0 0.0
        %496 = vmatpush2.msra.mxu0 0.0
        %497 = vmatprep.subr.mxu0 0.0
        %498 = vmatpush2.msra.mxu0 0.0
        %499 = vmatprep.subr.mxu0 0.0
        %500 = vmatpush2.msra.mxu0 0.0
        %501 = vmatprep.subr.mxu0 0.0
        %502 = vmatpush2.msra.mxu0 0.0
        %503 = vmatprep.subr.mxu0 0.0
        %504 = vmatpush2.msra.mxu0 0.0
        %505 = vmatprep.subr.mxu0 0.0
        %506 = vmatpush2.msra.mxu0 0.0
        %507 = vmatprep.subr.mxu0 0.0
        %508 = vmatpush2.msra.mxu0 0.0
        %509 = vmatprep.mubr.f32.mxu0 0.0
        %510 = vmatmul.mubr.f32.gmra.mxu0 %v437
        %v511 = vpop.f32.mrf.mxu0
        %v512 = vadd.f32 %v432, %v511
        %v513 = vpop.f32.mrf.mxu0
        %v514 = vadd.f32 %v434, %v513
        %515 = vdwg.mxu0
        %516 = vrot.lane.b32.xlu0 %v307, 15
        %v517 = vpop.permute.xlu0 %516
        %518 = vrot.lane.b32.xlu0 %v313, 15
        %v519 = vpop.permute.xlu0 %518
        %vm520 = vcmp.lt.s32.totalorder %v320, 15
        %v521 = vsel %vm520, %v517, %v519
        %v522 = vsel %vm520, %v519, %v517
        %v523 = vlaneseq
        %v524 = vshrl.u32 %v523, 7
        %v525 = vsub.s32 2, %v524
        %v526 = vrot.slane %v308, %v525
        %v527 = vlaneseq
        %v528 = vshrl.u32 %v527, 7
        %v529 = vsub.s32 2, %v528
        %v530 = vrot.slane %v309, %v529
        %v531 = vmul.f32 %v522, %v526
        %v532 = vmul.f32 %v521, %v530
        %s533 = scalar_lea.vmem %s2, 16
        %v534 = vld [vmem:[%s533] sm:$0xff]
        %v536 = vsel %vm354, %v534, 0
        %v539 = vsel %vm358, %v531, 0
        %v542 = vsel %vm358, %v532, 0
        %544 = vmatprep.subr.mxu0 0.0
        %545 = vmatpush1.msra.mxu0 0.0
        %546 = vmatprep.subr.mxu0 0.0
        %547 = vmatpush1.msra.mxu0 0.0
        %548 = vmatprep.subr.mxu0 0.0
        %549 = vmatpush1.msra.mxu0 0.0
        %550 = vmatprep.subr.mxu0 0.0
        %551 = vmatpush1.msra.mxu0 0.0
        %552 = vmatprep.subr.mxu0 0.0
        %553 = vmatpush1.msra.mxu0 0.0
        %554 = vmatprep.subr.mxu0 0.0
        %555 = vmatpush1.msra.mxu0 0.0
        %556 = vmatprep.subr.mxu0 0.0
        %557 = vmatpush1.msra.mxu0 0.0
        %558 = vmatprep.subr.mxu0 0.0
        %559 = vmatpush1.msra.mxu0 0.0
        %560 = vmatprep.subr.mxu0 0.0
        %561 = vmatpush1.msra.mxu0 0.0
        %562 = vmatprep.subr.mxu0 0.0
        %563 = vmatpush1.msra.mxu0 0.0
        %564 = vmatprep.subr.mxu0 0.0
        %565 = vmatpush1.msra.mxu0 0.0
        %566 = vmatprep.subr.mxu0 0.0
        %567 = vmatpush1.msra.mxu0 0.0
        %568 = vmatprep.subr.mxu0 0.0
        %569 = vmatpush1.msra.mxu0 0.0
        %570 = vmatprep.subr.mxu0 0.0
        %571 = vmatpush1.msra.mxu0 0.0
        %572 = vmatprep.subr.mxu0 0.0
        %573 = vmatpush1.msra.mxu0 0.0
        %574 = vmatprep.subr.mxu0 %v542
        %575 = vmatpush1.msra.mxu0 %v539
        %576 = vmatprep.subr.mxu0 0.0
        %577 = vmatpush2.msra.mxu0 0.0
        %578 = vmatprep.subr.mxu0 0.0
        %579 = vmatpush2.msra.mxu0 0.0
        %580 = vmatprep.subr.mxu0 0.0
        %581 = vmatpush2.msra.mxu0 0.0
        %582 = vmatprep.subr.mxu0 0.0
        %583 = vmatpush2.msra.mxu0 0.0
        %584 = vmatprep.subr.mxu0 0.0
        %585 = vmatpush2.msra.mxu0 0.0
        %586 = vmatprep.subr.mxu0 0.0
        %587 = vmatpush2.msra.mxu0 0.0
        %588 = vmatprep.subr.mxu0 0.0
        %589 = vmatpush2.msra.mxu0 0.0
        %590 = vmatprep.subr.mxu0 0.0
        %591 = vmatpush2.msra.mxu0 0.0
        %592 = vmatprep.subr.mxu0 0.0
        %593 = vmatpush2.msra.mxu0 0.0
        %594 = vmatprep.subr.mxu0 0.0
        %595 = vmatpush2.msra.mxu0 0.0
        %596 = vmatprep.subr.mxu0 0.0
        %597 = vmatpush2.msra.mxu0 0.0
        %598 = vmatprep.subr.mxu0 0.0
        %599 = vmatpush2.msra.mxu0 0.0
        %600 = vmatprep.subr.mxu0 0.0
        %601 = vmatpush2.msra.mxu0 0.0
        %602 = vmatprep.subr.mxu0 0.0
        %603 = vmatpush2.msra.mxu0 0.0
        %604 = vmatprep.subr.mxu0 0.0
        %605 = vmatpush2.msra.mxu0 0.0
        %606 = vmatprep.subr.mxu0 0.0
        %607 = vmatpush2.msra.mxu0 0.0
        %608 = vmatprep.mubr.f32.mxu0 0.0
        %609 = vmatmul.mubr.f32.gmra.mxu0 %v536
        %v610 = vpop.f32.mrf.mxu0
        %v611 = vadd.f32 0.0, %v610
        %v612 = vpop.f32.mrf.mxu0
        %v613 = vadd.f32 0.0, %v612
        %614 = vdwg.mxu0
        %v615 = vadd.f32 %v512, %v611
        %v616 = vadd.f32 %v514, %v613
        %617 = vrot.lane.b32.xlu0 %v307, 1
        %v618 = vpop.permute.xlu0 %617
        %619 = vrot.lane.b32.xlu0 %v313, 1
        %v620 = vpop.permute.xlu0 %619
        %vm621 = vcmp.lt.s32.totalorder %v320, 1
        %v622 = vsel %vm621, %v618, %v620
        %v623 = vsel %vm621, %v620, %v618
        %v624 = vlaneseq
        %v625 = vshrl.u32 %v624, 7
        %v626 = vsub.s32 3, %v625
        %v627 = vrot.slane %v308, %v626
        %v628 = vlaneseq
        %v629 = vshrl.u32 %v628, 7
        %v630 = vsub.s32 3, %v629
        %v631 = vrot.slane %v309, %v630
        %v632 = vmul.f32 %v623, %v627
        %v633 = vmul.f32 %v622, %v631
        %s634 = scalar_lea.vmem %s2, 24
        %v635 = vld [vmem:[%s634] sm:$0xff]
        %v637 = vsel %vm354, %v635, 0
        %v640 = vsel %vm358, %v632, 0
        %v643 = vsel %vm358, %v633, 0
        %645 = vmatprep.subr.mxu0 0.0
        %646 = vmatpush1.msra.mxu0 0.0
        %647 = vmatprep.subr.mxu0 0.0
        %648 = vmatpush1.msra.mxu0 0.0
        %649 = vmatprep.subr.mxu0 0.0
        %650 = vmatpush1.msra.mxu0 0.0
        %651 = vmatprep.subr.mxu0 0.0
        %652 = vmatpush1.msra.mxu0 0.0
        %653 = vmatprep.subr.mxu0 0.0
        %654 = vmatpush1.msra.mxu0 0.0
        %655 = vmatprep.subr.mxu0 0.0
        %656 = vmatpush1.msra.mxu0 0.0
        %657 = vmatprep.subr.mxu0 0.0
        %658 = vmatpush1.msra.mxu0 0.0
        %659 = vmatprep.subr.mxu0 0.0
        %660 = vmatpush1.msra.mxu0 0.0
        %661 = vmatprep.subr.mxu0 0.0
        %662 = vmatpush1.msra.mxu0 0.0
        %663 = vmatprep.subr.mxu0 0.0
        %664 = vmatpush1.msra.mxu0 0.0
        %665 = vmatprep.subr.mxu0 0.0
        %666 = vmatpush1.msra.mxu0 0.0
        %667 = vmatprep.subr.mxu0 0.0
        %668 = vmatpush1.msra.mxu0 0.0
        %669 = vmatprep.subr.mxu0 0.0
        %670 = vmatpush1.msra.mxu0 0.0
        %671 = vmatprep.subr.mxu0 0.0
        %672 = vmatpush1.msra.mxu0 0.0
        %673 = vmatprep.subr.mxu0 0.0
        %674 = vmatpush1.msra.mxu0 0.0
        %675 = vmatprep.subr.mxu0 %v643
        %676 = vmatpush1.msra.mxu0 %v640
        %677 = vmatprep.subr.mxu0 0.0
        %678 = vmatpush2.msra.mxu0 0.0
        %679 = vmatprep.subr.mxu0 0.0
        %680 = vmatpush2.msra.mxu0 0.0
        %681 = vmatprep.subr.mxu0 0.0
        %682 = vmatpush2.msra.mxu0 0.0
        %683 = vmatprep.subr.mxu0 0.0
        %684 = vmatpush2.msra.mxu0 0.0
        %685 = vmatprep.subr.mxu0 0.0
        %686 = vmatpush2.msra.mxu0 0.0
        %687 = vmatprep.subr.mxu0 0.0
        %688 = vmatpush2.msra.mxu0 0.0
        %689 = vmatprep.subr.mxu0 0.0
        %690 = vmatpush2.msra.mxu0 0.0
        %691 = vmatprep.subr.mxu0 0.0
        %692 = vmatpush2.msra.mxu0 0.0
        %693 = vmatprep.subr.mxu0 0.0
        %694 = vmatpush2.msra.mxu0 0.0
        %695 = vmatprep.subr.mxu0 0.0
        %696 = vmatpush2.msra.mxu0 0.0
        %697 = vmatprep.subr.mxu0 0.0
        %698 = vmatpush2.msra.mxu0 0.0
        %699 = vmatprep.subr.mxu0 0.0
        %700 = vmatpush2.msra.mxu0 0.0
        %701 = vmatprep.subr.mxu0 0.0
        %702 = vmatpush2.msra.mxu0 0.0
        %703 = vmatprep.subr.mxu0 0.0
        %704 = vmatpush2.msra.mxu0 0.0
        %705 = vmatprep.subr.mxu0 0.0
        %706 = vmatpush2.msra.mxu0 0.0
        %707 = vmatprep.subr.mxu0 0.0
        %708 = vmatpush2.msra.mxu0 0.0
        %709 = vmatprep.mubr.f32.mxu0 0.0
        %710 = vmatmul.mubr.f32.gmra.mxu0 %v637
        %v711 = vpop.f32.mrf.mxu0
        %v712 = vadd.f32 0.0, %v711
        %v713 = vpop.f32.mrf.mxu0
        %v714 = vadd.f32 0.0, %v713
        %715 = vdwg.mxu0
        %v716 = vadd.f32 %v615, %v712
        %v717 = vadd.f32 %v616, %v714
        %s718 = scalar_lea.vmem %s2, 32
        %v719 = vld [vmem:[%s718] sm:$0xff]
        %v721 = vsel %vm354, %v719, 0
        %v723 = vsel %vm358, %v307, 0
        %v725 = vsel %vm358, %v313, 0
        %727 = vmatprep.subr.mxu0 0.0
        %728 = vmatpush1.msra.mxu0 0.0
        %729 = vmatprep.subr.mxu0 0.0
        %730 = vmatpush1.msra.mxu0 0.0
        %731 = vmatprep.subr.mxu0 0.0
        %732 = vmatpush1.msra.mxu0 0.0
        %733 = vmatprep.subr.mxu0 0.0
        %734 = vmatpush1.msra.mxu0 0.0
        %735 = vmatprep.subr.mxu0 0.0
        %736 = vmatpush1.msra.mxu0 0.0
        %737 = vmatprep.subr.mxu0 0.0
        %738 = vmatpush1.msra.mxu0 0.0
        %739 = vmatprep.subr.mxu0 0.0
        %740 = vmatpush1.msra.mxu0 0.0
        %741 = vmatprep.subr.mxu0 0.0
        %742 = vmatpush1.msra.mxu0 0.0
        %743 = vmatprep.subr.mxu0 0.0
        %744 = vmatpush1.msra.mxu0 0.0
        %745 = vmatprep.subr.mxu0 0.0
        %746 = vmatpush1.msra.mxu0 0.0
        %747 = vmatprep.subr.mxu0 0.0
        %748 = vmatpush1.msra.mxu0 0.0
        %749 = vmatprep.subr.mxu0 0.0
        %750 = vmatpush1.msra.mxu0 0.0
        %751 = vmatprep.subr.mxu0 0.0
        %752 = vmatpush1.msra.mxu0 0.0
        %753 = vmatprep.subr.mxu0 0.0
        %754 = vmatpush1.msra.mxu0 0.0
        %755 = vmatprep.subr.mxu0 0.0
        %756 = vmatpush1.msra.mxu0 0.0
        %757 = vmatprep.subr.mxu0 %v725
        %758 = vmatpush1.msra.mxu0 %v723
        %759 = vmatprep.subr.mxu0 0.0
        %760 = vmatpush2.msra.mxu0 0.0
        %761 = vmatprep.subr.mxu0 0.0
        %762 = vmatpush2.msra.mxu0 0.0
        %763 = vmatprep.subr.mxu0 0.0
        %764 = vmatpush2.msra.mxu0 0.0
        %765 = vmatprep.subr.mxu0 0.0
        %766 = vmatpush2.msra.mxu0 0.0
        %767 = vmatprep.subr.mxu0 0.0
        %768 = vmatpush2.msra.mxu0 0.0
        %769 = vmatprep.subr.mxu0 0.0
        %770 = vmatpush2.msra.mxu0 0.0
        %771 = vmatprep.subr.mxu0 0.0
        %772 = vmatpush2.msra.mxu0 0.0
        %773 = vmatprep.subr.mxu0 0.0
        %774 = vmatpush2.msra.mxu0 0.0
        %775 = vmatprep.subr.mxu0 0.0
        %776 = vmatpush2.msra.mxu0 0.0
        %777 = vmatprep.subr.mxu0 0.0
        %778 = vmatpush2.msra.mxu0 0.0
        %779 = vmatprep.subr.mxu0 0.0
        %780 = vmatpush2.msra.mxu0 0.0
        %781 = vmatprep.subr.mxu0 0.0
        %782 = vmatpush2.msra.mxu0 0.0
        %783 = vmatprep.subr.mxu0 0.0
        %784 = vmatpush2.msra.mxu0 0.0
        %785 = vmatprep.subr.mxu0 0.0
        %786 = vmatpush2.msra.mxu0 0.0
        %787 = vmatprep.subr.mxu0 0.0
        %788 = vmatpush2.msra.mxu0 0.0
        %789 = vmatprep.subr.mxu0 0.0
        %790 = vmatpush2.msra.mxu0 0.0
        %791 = vmatprep.mubr.f32.mxu0 0.0
        %792 = vmatmul.mubr.f32.gmra.mxu0 %v721
        %v793 = vpop.f32.mrf.mxu0
        %v794 = vadd.f32 0.0, %v793
        %v795 = vpop.f32.mrf.mxu0
        %v796 = vadd.f32 0.0, %v795
        %797 = vdwg.mxu0
        %v798 = vadd.f32 %v716, %v794
        %v799 = vadd.f32 %v717, %v796
        %800 = vrot.lane.b32.xlu0 %v307, 127
        %v801 = vpop.permute.xlu0 %800
        %802 = vrot.lane.b32.xlu0 %v313, 127
        %v803 = vpop.permute.xlu0 %802
        %vm804 = vcmp.lt.s32.totalorder %v320, 127
        %v805 = vsel %vm804, %v801, %v803
        %v806 = vsel %vm804, %v803, %v801
        %v807 = vlaneseq
        %v808 = vshrl.u32 %v807, 7
        %v809 = vsub.s32 5, %v808
        %v810 = vrot.slane %v308, %v809
        %v811 = vlaneseq
        %v812 = vshrl.u32 %v811, 7
        %v813 = vsub.s32 5, %v812
        %v814 = vrot.slane %v309, %v813
        %v815 = vmul.f32 %v805, %v810
        %v816 = vmul.f32 %v806, %v814
        %s817 = scalar_lea.vmem %s2, 40
        %v818 = vld [vmem:[%s817] sm:$0xff]
        %v820 = vsel %vm354, %v818, 0
        %v823 = vsel %vm358, %v815, 0
        %v826 = vsel %vm358, %v816, 0
        %828 = vmatprep.subr.mxu0 0.0
        %829 = vmatpush1.msra.mxu0 0.0
        %830 = vmatprep.subr.mxu0 0.0
        %831 = vmatpush1.msra.mxu0 0.0
        %832 = vmatprep.subr.mxu0 0.0
        %833 = vmatpush1.msra.mxu0 0.0
        %834 = vmatprep.subr.mxu0 0.0
        %835 = vmatpush1.msra.mxu0 0.0
        %836 = vmatprep.subr.mxu0 0.0
        %837 = vmatpush1.msra.mxu0 0.0
        %838 = vmatprep.subr.mxu0 0.0
        %839 = vmatpush1.msra.mxu0 0.0
        %840 = vmatprep.subr.mxu0 0.0
        %841 = vmatpush1.msra.mxu0 0.0
        %842 = vmatprep.subr.mxu0 0.0
        %843 = vmatpush1.msra.mxu0 0.0
        %844 = vmatprep.subr.mxu0 0.0
        %845 = vmatpush1.msra.mxu0 0.0
        %846 = vmatprep.subr.mxu0 0.0
        %847 = vmatpush1.msra.mxu0 0.0
        %848 = vmatprep.subr.mxu0 0.0
        %849 = vmatpush1.msra.mxu0 0.0
        %850 = vmatprep.subr.mxu0 0.0
        %851 = vmatpush1.msra.mxu0 0.0
        %852 = vmatprep.subr.mxu0 0.0
        %853 = vmatpush1.msra.mxu0 0.0
        %854 = vmatprep.subr.mxu0 0.0
        %855 = vmatpush1.msra.mxu0 0.0
        %856 = vmatprep.subr.mxu0 0.0
        %857 = vmatpush1.msra.mxu0 0.0
        %858 = vmatprep.subr.mxu0 %v826
        %859 = vmatpush1.msra.mxu0 %v823
        %860 = vmatprep.subr.mxu0 0.0
        %861 = vmatpush2.msra.mxu0 0.0
        %862 = vmatprep.subr.mxu0 0.0
        %863 = vmatpush2.msra.mxu0 0.0
        %864 = vmatprep.subr.mxu0 0.0
        %865 = vmatpush2.msra.mxu0 0.0
        %866 = vmatprep.subr.mxu0 0.0
        %867 = vmatpush2.msra.mxu0 0.0
        %868 = vmatprep.subr.mxu0 0.0
        %869 = vmatpush2.msra.mxu0 0.0
        %870 = vmatprep.subr.mxu0 0.0
        %871 = vmatpush2.msra.mxu0 0.0
        %872 = vmatprep.subr.mxu0 0.0
        %873 = vmatpush2.msra.mxu0 0.0
        %874 = vmatprep.subr.mxu0 0.0
        %875 = vmatpush2.msra.mxu0 0.0
        %876 = vmatprep.subr.mxu0 0.0
        %877 = vmatpush2.msra.mxu0 0.0
        %878 = vmatprep.subr.mxu0 0.0
        %879 = vmatpush2.msra.mxu0 0.0
        %880 = vmatprep.subr.mxu0 0.0
        %881 = vmatpush2.msra.mxu0 0.0
        %882 = vmatprep.subr.mxu0 0.0
        %883 = vmatpush2.msra.mxu0 0.0
        %884 = vmatprep.subr.mxu0 0.0
        %885 = vmatpush2.msra.mxu0 0.0
        %886 = vmatprep.subr.mxu0 0.0
        %887 = vmatpush2.msra.mxu0 0.0
        %888 = vmatprep.subr.mxu0 0.0
        %889 = vmatpush2.msra.mxu0 0.0
        %890 = vmatprep.subr.mxu0 0.0
        %891 = vmatpush2.msra.mxu0 0.0
        %892 = vmatprep.mubr.f32.mxu0 0.0
        %893 = vmatmul.mubr.f32.gmra.mxu0 %v820
        %v894 = vpop.f32.mrf.mxu0
        %v895 = vadd.f32 0.0, %v894
        %v896 = vpop.f32.mrf.mxu0
        %v897 = vadd.f32 0.0, %v896
        %898 = vdwg.mxu0
        %v899 = vadd.f32 %v798, %v895
        %v900 = vadd.f32 %v799, %v897
        %901 = vrot.lane.b32.xlu0 %v307, 113
        %v902 = vpop.permute.xlu0 %901
        %903 = vrot.lane.b32.xlu0 %v313, 113
        %v904 = vpop.permute.xlu0 %903
        %vm905 = vcmp.lt.s32.totalorder %v320, 113
        %v906 = vsel %vm905, %v902, %v904
        %v907 = vsel %vm905, %v904, %v902
        %v908 = vlaneseq
        %v909 = vshrl.u32 %v908, 7
        %v910 = vsub.s32 6, %v909
        %v911 = vrot.slane %v308, %v910
        %v912 = vlaneseq
        %v913 = vshrl.u32 %v912, 7
        %v914 = vsub.s32 6, %v913
        %v915 = vrot.slane %v309, %v914
        %v916 = vmul.f32 %v906, %v911
        %v917 = vmul.f32 %v907, %v915
        %s918 = scalar_lea.vmem %s2, 48
        %v919 = vld [vmem:[%s918] sm:$0xff]
        %v921 = vsel %vm354, %v919, 0
        %v924 = vsel %vm358, %v916, 0
        %v927 = vsel %vm358, %v917, 0
        %929 = vmatprep.subr.mxu0 0.0
        %930 = vmatpush1.msra.mxu0 0.0
        %931 = vmatprep.subr.mxu0 0.0
        %932 = vmatpush1.msra.mxu0 0.0
        %933 = vmatprep.subr.mxu0 0.0
        %934 = vmatpush1.msra.mxu0 0.0
        %935 = vmatprep.subr.mxu0 0.0
        %936 = vmatpush1.msra.mxu0 0.0
        %937 = vmatprep.subr.mxu0 0.0
        %938 = vmatpush1.msra.mxu0 0.0
        %939 = vmatprep.subr.mxu0 0.0
        %940 = vmatpush1.msra.mxu0 0.0
        %941 = vmatprep.subr.mxu0 0.0
        %942 = vmatpush1.msra.mxu0 0.0
        %943 = vmatprep.subr.mxu0 0.0
        %944 = vmatpush1.msra.mxu0 0.0
        %945 = vmatprep.subr.mxu0 0.0
        %946 = vmatpush1.msra.mxu0 0.0
        %947 = vmatprep.subr.mxu0 0.0
        %948 = vmatpush1.msra.mxu0 0.0
        %949 = vmatprep.subr.mxu0 0.0
        %950 = vmatpush1.msra.mxu0 0.0
        %951 = vmatprep.subr.mxu0 0.0
        %952 = vmatpush1.msra.mxu0 0.0
        %953 = vmatprep.subr.mxu0 0.0
        %954 = vmatpush1.msra.mxu0 0.0
        %955 = vmatprep.subr.mxu0 0.0
        %956 = vmatpush1.msra.mxu0 0.0
        %957 = vmatprep.subr.mxu0 0.0
        %958 = vmatpush1.msra.mxu0 0.0
        %959 = vmatprep.subr.mxu0 %v927
        %960 = vmatpush1.msra.mxu0 %v924
        %961 = vmatprep.subr.mxu0 0.0
        %962 = vmatpush2.msra.mxu0 0.0
        %963 = vmatprep.subr.mxu0 0.0
        %964 = vmatpush2.msra.mxu0 0.0
        %965 = vmatprep.subr.mxu0 0.0
        %966 = vmatpush2.msra.mxu0 0.0
        %967 = vmatprep.subr.mxu0 0.0
        %968 = vmatpush2.msra.mxu0 0.0
        %969 = vmatprep.subr.mxu0 0.0
        %970 = vmatpush2.msra.mxu0 0.0
        %971 = vmatprep.subr.mxu0 0.0
        %972 = vmatpush2.msra.mxu0 0.0
        %973 = vmatprep.subr.mxu0 0.0
        %974 = vmatpush2.msra.mxu0 0.0
        %975 = vmatprep.subr.mxu0 0.0
        %976 = vmatpush2.msra.mxu0 0.0
        %977 = vmatprep.subr.mxu0 0.0
        %978 = vmatpush2.msra.mxu0 0.0
        %979 = vmatprep.subr.mxu0 0.0
        %980 = vmatpush2.msra.mxu0 0.0
        %981 = vmatprep.subr.mxu0 0.0
        %982 = vmatpush2.msra.mxu0 0.0
        %983 = vmatprep.subr.mxu0 0.0
        %984 = vmatpush2.msra.mxu0 0.0
        %985 = vmatprep.subr.mxu0 0.0
        %986 = vmatpush2.msra.mxu0 0.0
        %987 = vmatprep.subr.mxu0 0.0
        %988 = vmatpush2.msra.mxu0 0.0
        %989 = vmatprep.subr.mxu0 0.0
        %990 = vmatpush2.msra.mxu0 0.0
        %991 = vmatprep.subr.mxu0 0.0
        %992 = vmatpush2.msra.mxu0 0.0
        %993 = vmatprep.mubr.f32.mxu0 0.0
        %994 = vmatmul.mubr.f32.gmra.mxu0 %v921
        %v995 = vpop.f32.mrf.mxu0
        %v996 = vadd.f32 0.0, %v995
        %v997 = vpop.f32.mrf.mxu0
        %v998 = vadd.f32 0.0, %v997
        %999 = vdwg.mxu0
        %v1000 = vadd.f32 %v899, %v996
        %v1001 = vadd.f32 %v900, %v998
        %1002 = vrot.lane.b32.xlu0 %v307, 112
        %v1003 = vpop.permute.xlu0 %1002
        %1004 = vrot.lane.b32.xlu0 %v313, 112
        %v1005 = vpop.permute.xlu0 %1004
        %vm1006 = vcmp.lt.s32.totalorder %v320, 112
        %v1007 = vsel %vm1006, %v1003, %v1005
        %v1008 = vsel %vm1006, %v1005, %v1003
        %v1009 = vlaneseq
        %v1010 = vshrl.u32 %v1009, 7
        %v1011 = vsub.s32 7, %v1010
        %v1012 = vrot.slane %v308, %v1011
        %v1013 = vlaneseq
        %v1014 = vshrl.u32 %v1013, 7
        %v1015 = vsub.s32 7, %v1014
        %v1016 = vrot.slane %v309, %v1015
        %v1017 = vmul.f32 %v1007, %v1012
        %v1018 = vmul.f32 %v1008, %v1016
        %s1019 = scalar_lea.vmem %s2, 56
        %v1020 = vld [vmem:[%s1019] sm:$0xff]
        %v1022 = vsel %vm354, %v1020, 0
        %v1025 = vsel %vm358, %v1017, 0
        %v1028 = vsel %vm358, %v1018, 0
        %1030 = vmatprep.subr.mxu0 0.0
        %1031 = vmatpush1.msra.mxu0 0.0
        %1032 = vmatprep.subr.mxu0 0.0
        %1033 = vmatpush1.msra.mxu0 0.0
        %1034 = vmatprep.subr.mxu0 0.0
        %1035 = vmatpush1.msra.mxu0 0.0
        %1036 = vmatprep.subr.mxu0 0.0
        %1037 = vmatpush1.msra.mxu0 0.0
        %1038 = vmatprep.subr.mxu0 0.0
        %1039 = vmatpush1.msra.mxu0 0.0
        %1040 = vmatprep.subr.mxu0 0.0
        %1041 = vmatpush1.msra.mxu0 0.0
        %1042 = vmatprep.subr.mxu0 0.0
        %1043 = vmatpush1.msra.mxu0 0.0
        %1044 = vmatprep.subr.mxu0 0.0
        %1045 = vmatpush1.msra.mxu0 0.0
        %1046 = vmatprep.subr.mxu0 0.0
        %1047 = vmatpush1.msra.mxu0 0.0
        %1048 = vmatprep.subr.mxu0 0.0
        %1049 = vmatpush1.msra.mxu0 0.0
        %1050 = vmatprep.subr.mxu0 0.0
        %1051 = vmatpush1.msra.mxu0 0.0
        %1052 = vmatprep.subr.mxu0 0.0
        %1053 = vmatpush1.msra.mxu0 0.0
        %1054 = vmatprep.subr.mxu0 0.0
        %1055 = vmatpush1.msra.mxu0 0.0
        %1056 = vmatprep.subr.mxu0 0.0
        %1057 = vmatpush1.msra.mxu0 0.0
        %1058 = vmatprep.subr.mxu0 0.0
        %1059 = vmatpush1.msra.mxu0 0.0
        %1060 = vmatprep.subr.mxu0 %v1028
        %1061 = vmatpush1.msra.mxu0 %v1025
        %1062 = vmatprep.subr.mxu0 0.0
        %1063 = vmatpush2.msra.mxu0 0.0
        %1064 = vmatprep.subr.mxu0 0.0
        %1065 = vmatpush2.msra.mxu0 0.0
        %1066 = vmatprep.subr.mxu0 0.0
        %1067 = vmatpush2.msra.mxu0 0.0
        %1068 = vmatprep.subr.mxu0 0.0
        %1069 = vmatpush2.msra.mxu0 0.0
        %1070 = vmatprep.subr.mxu0 0.0
        %1071 = vmatpush2.msra.mxu0 0.0
        %1072 = vmatprep.subr.mxu0 0.0
        %1073 = vmatpush2.msra.mxu0 0.0
        %1074 = vmatprep.subr.mxu0 0.0
        %1075 = vmatpush2.msra.mxu0 0.0
        %1076 = vmatprep.subr.mxu0 0.0
        %1077 = vmatpush2.msra.mxu0 0.0
        %1078 = vmatprep.subr.mxu0 0.0
        %1079 = vmatpush2.msra.mxu0 0.0
        %1080 = vmatprep.subr.mxu0 0.0
        %1081 = vmatpush2.msra.mxu0 0.0
        %1082 = vmatprep.subr.mxu0 0.0
        %1083 = vmatpush2.msra.mxu0 0.0
        %1084 = vmatprep.subr.mxu0 0.0
        %1085 = vmatpush2.msra.mxu0 0.0
        %1086 = vmatprep.subr.mxu0 0.0
        %1087 = vmatpush2.msra.mxu0 0.0
        %1088 = vmatprep.subr.mxu0 0.0
        %1089 = vmatpush2.msra.mxu0 0.0
        %1090 = vmatprep.subr.mxu0 0.0
        %1091 = vmatpush2.msra.mxu0 0.0
        %1092 = vmatprep.subr.mxu0 0.0
        %1093 = vmatpush2.msra.mxu0 0.0
        %1094 = vmatprep.mubr.f32.mxu0 0.0
        %1095 = vmatmul.mubr.f32.gmra.mxu0 %v1022
        %v1096 = vpop.f32.mrf.mxu0
        %v1097 = vadd.f32 0.0, %v1096
        %v1098 = vpop.f32.mrf.mxu0
        %v1099 = vadd.f32 0.0, %v1098
        %1100 = vdwg.mxu0
        %v1101 = vadd.f32 %v1000, %v1097
        %v1102 = vadd.f32 %v1001, %v1099
        %1103 = vrot.lane.b32.xlu0 %v307, 111
        %v1104 = vpop.permute.xlu0 %1103
        %1105 = vrot.lane.b32.xlu0 %v313, 111
        %v1106 = vpop.permute.xlu0 %1105
        %vm1107 = vcmp.lt.s32.totalorder %v320, 111
        %v1108 = vsel %vm1107, %v1104, %v1106
        %v1109 = vsel %vm1107, %v1106, %v1104
        %v1110 = vlaneseq
        %v1111 = vshrl.u32 %v1110, 7
        %v1112 = vsub.s32 0, %v1111
        %v1113 = vrot.slane %v310, %v1112
        %v1114 = vlaneseq
        %v1115 = vshrl.u32 %v1114, 7
        %v1116 = vsub.s32 0, %v1115
        %v1117 = vrot.slane %v311, %v1116
        %v1118 = vmul.f32 %v1108, %v1113
        %v1119 = vmul.f32 %v1109, %v1117
        %s1120 = scalar_lea.vmem %s2, 64
        %v1121 = vld [vmem:[%s1120] sm:$0xff]
        %v1123 = vsel %vm354, %v1121, 0
        %v1126 = vsel %vm358, %v1118, 0
        %v1129 = vsel %vm358, %v1119, 0
        %1131 = vmatprep.subr.mxu0 0.0
        %1132 = vmatpush1.msra.mxu0 0.0
        %1133 = vmatprep.subr.mxu0 0.0
        %1134 = vmatpush1.msra.mxu0 0.0
        %1135 = vmatprep.subr.mxu0 0.0
        %1136 = vmatpush1.msra.mxu0 0.0
        %1137 = vmatprep.subr.mxu0 0.0
        %1138 = vmatpush1.msra.mxu0 0.0
        %1139 = vmatprep.subr.mxu0 0.0
        %1140 = vmatpush1.msra.mxu0 0.0
        %1141 = vmatprep.subr.mxu0 0.0
        %1142 = vmatpush1.msra.mxu0 0.0
        %1143 = vmatprep.subr.mxu0 0.0
        %1144 = vmatpush1.msra.mxu0 0.0
        %1145 = vmatprep.subr.mxu0 0.0
        %1146 = vmatpush1.msra.mxu0 0.0
        %1147 = vmatprep.subr.mxu0 0.0
        %1148 = vmatpush1.msra.mxu0 0.0
        %1149 = vmatprep.subr.mxu0 0.0
        %1150 = vmatpush1.msra.mxu0 0.0
        %1151 = vmatprep.subr.mxu0 0.0
        %1152 = vmatpush1.msra.mxu0 0.0
        %1153 = vmatprep.subr.mxu0 0.0
        %1154 = vmatpush1.msra.mxu0 0.0
        %1155 = vmatprep.subr.mxu0 0.0
        %1156 = vmatpush1.msra.mxu0 0.0
        %1157 = vmatprep.subr.mxu0 0.0
        %1158 = vmatpush1.msra.mxu0 0.0
        %1159 = vmatprep.subr.mxu0 0.0
        %1160 = vmatpush1.msra.mxu0 0.0
        %1161 = vmatprep.subr.mxu0 %v1129
        %1162 = vmatpush1.msra.mxu0 %v1126
        %1163 = vmatprep.subr.mxu0 0.0
        %1164 = vmatpush2.msra.mxu0 0.0
        %1165 = vmatprep.subr.mxu0 0.0
        %1166 = vmatpush2.msra.mxu0 0.0
        %1167 = vmatprep.subr.mxu0 0.0
        %1168 = vmatpush2.msra.mxu0 0.0
        %1169 = vmatprep.subr.mxu0 0.0
        %1170 = vmatpush2.msra.mxu0 0.0
        %1171 = vmatprep.subr.mxu0 0.0
        %1172 = vmatpush2.msra.mxu0 0.0
        %1173 = vmatprep.subr.mxu0 0.0
        %1174 = vmatpush2.msra.mxu0 0.0
        %1175 = vmatprep.subr.mxu0 0.0
        %1176 = vmatpush2.msra.mxu0 0.0
        %1177 = vmatprep.subr.mxu0 0.0
        %1178 = vmatpush2.msra.mxu0 0.0
        %1179 = vmatprep.subr.mxu0 0.0
        %1180 = vmatpush2.msra.mxu0 0.0
        %1181 = vmatprep.subr.mxu0 0.0
        %1182 = vmatpush2.msra.mxu0 0.0
        %1183 = vmatprep.subr.mxu0 0.0
        %1184 = vmatpush2.msra.mxu0 0.0
        %1185 = vmatprep.subr.mxu0 0.0
        %1186 = vmatpush2.msra.mxu0 0.0
        %1187 = vmatprep.subr.mxu0 0.0
        %1188 = vmatpush2.msra.mxu0 0.0
        %1189 = vmatprep.subr.mxu0 0.0
        %1190 = vmatpush2.msra.mxu0 0.0
        %1191 = vmatprep.subr.mxu0 0.0
        %1192 = vmatpush2.msra.mxu0 0.0
        %1193 = vmatprep.subr.mxu0 0.0
        %1194 = vmatpush2.msra.mxu0 0.0
        %1195 = vmatprep.mubr.f32.mxu0 0.0
        %1196 = vmatmul.mubr.f32.gmra.mxu0 %v1123
        %v1197 = vpop.f32.mrf.mxu0
        %v1198 = vadd.f32 0.0, %v1197
        %v1199 = vpop.f32.mrf.mxu0
        %v1200 = vadd.f32 0.0, %v1199
        %1201 = vdwg.mxu0
        %v1202 = vadd.f32 %v1101, %v1198
        %v1203 = vadd.f32 %v1102, %v1200
        %v1204 = vld [vmem:[%s3] sm:$0xff]
        %1206 = vset.pattern.permute.xlu0 0
        %1207 = vperm.xlu0 %1206, %v1204
        %v1208 = vpop.permute.xlu0 %1207
        %v1210 = vadd.f32 %v1202, %v1208
        %v1211 = vadd.f32 %v1203, %v1208
        %v1212 = vmax.f32 %v1210, 0.0
        %v1213 = vmax.f32 %v1211, 0.0
        %1214 = vrot.lane.b32.xlu0 %v1212, 17
        %v1215 = vpop.permute.xlu0 %1214
        %1216 = vrot.lane.b32.xlu0 %v1213, 17
        %v1217 = vpop.permute.xlu0 %1216
        %v1218 = vsel %vm321, %v1215, %v1217
        %v1219 = vsel %vm321, %v1217, %v1215
        %v1220 = vmul.f32 %v1219, %v327
        %v1221 = vmul.f32 %v1218, %v331
        %v1222 = vld [vmem:[%s4] sm:$0xff]
        %1223 = vrot.lane.b32.xlu0 %v1212, 16
        %v1224 = vpop.permute.xlu0 %1223
        %1225 = vrot.lane.b32.xlu0 %v1213, 16
        %v1226 = vpop.permute.xlu0 %1225
        %v1227 = vsel %vm339, %v1224, %v1226
        %v1228 = vsel %vm339, %v1226, %v1224
        %v1229 = vmul.f32 %v1228, %v345
        %v1230 = vmul.f32 %v1227, %v349
        %s1231 = scalar_lea.vmem %s4, 8
        %v1232 = vld [vmem:[%s1231] sm:$0xff]
        %vm1233 = vcmask 64512
        %v1235 = vsel %vm1233, %v1232, 0
        %1237 = vmatprep.subr.mxu0 0.0
        %1238 = vmatpush1.msra.mxu0 0.0
        %1239 = vmatprep.subr.mxu0 0.0
        %1240 = vmatpush1.msra.mxu0 0.0
        %1241 = vmatprep.subr.mxu0 0.0
        %1242 = vmatpush1.msra.mxu0 0.0
        %1243 = vmatprep.subr.mxu0 0.0
        %1244 = vmatpush1.msra.mxu0 0.0
        %1245 = vmatprep.subr.mxu0 0.0
        %1246 = vmatpush1.msra.mxu0 0.0
        %1247 = vmatprep.subr.mxu0 0.0
        %1248 = vmatpush1.msra.mxu0 0.0
        %1249 = vmatprep.subr.mxu0 0.0
        %1250 = vmatpush1.msra.mxu0 0.0
        %1251 = vmatprep.subr.mxu0 0.0
        %1252 = vmatpush1.msra.mxu0 0.0
        %1253 = vmatprep.subr.mxu0 0.0
        %1254 = vmatpush1.msra.mxu0 0.0
        %1255 = vmatprep.subr.mxu0 0.0
        %1256 = vmatpush1.msra.mxu0 0.0
        %1257 = vmatprep.subr.mxu0 0.0
        %1258 = vmatpush1.msra.mxu0 0.0
        %1259 = vmatprep.subr.mxu0 0.0
        %1260 = vmatpush1.msra.mxu0 0.0
        %1261 = vmatprep.subr.mxu0 0.0
        %1262 = vmatpush1.msra.mxu0 0.0
        %1263 = vmatprep.subr.mxu0 0.0
        %1264 = vmatpush1.msra.mxu0 0.0
        %1265 = vmatprep.subr.mxu0 0.0
        %1266 = vmatpush1.msra.mxu0 0.0
        %1267 = vmatprep.subr.mxu0 %v1230
        %1268 = vmatpush1.msra.mxu0 %v1229
        %1269 = vmatprep.subr.mxu0 0.0
        %1270 = vmatpush2.msra.mxu0 0.0
        %1271 = vmatprep.subr.mxu0 0.0
        %1272 = vmatpush2.msra.mxu0 0.0
        %1273 = vmatprep.subr.mxu0 0.0
        %1274 = vmatpush2.msra.mxu0 0.0
        %1275 = vmatprep.subr.mxu0 0.0
        %1276 = vmatpush2.msra.mxu0 0.0
        %1277 = vmatprep.subr.mxu0 0.0
        %1278 = vmatpush2.msra.mxu0 0.0
        %1279 = vmatprep.subr.mxu0 0.0
        %1280 = vmatpush2.msra.mxu0 0.0
        %1281 = vmatprep.subr.mxu0 0.0
        %1282 = vmatpush2.msra.mxu0 0.0
        %1283 = vmatprep.subr.mxu0 0.0
        %1284 = vmatpush2.msra.mxu0 0.0
        %1285 = vmatprep.subr.mxu0 0.0
        %1286 = vmatpush2.msra.mxu0 0.0
        %1287 = vmatprep.subr.mxu0 0.0
        %1288 = vmatpush2.msra.mxu0 0.0
        %1289 = vmatprep.subr.mxu0 0.0
        %1290 = vmatpush2.msra.mxu0 0.0
        %1291 = vmatprep.subr.mxu0 0.0
        %1292 = vmatpush2.msra.mxu0 0.0
        %1293 = vmatprep.subr.mxu0 0.0
        %1294 = vmatpush2.msra.mxu0 0.0
        %1295 = vmatprep.subr.mxu0 0.0
        %1296 = vmatpush2.msra.mxu0 0.0
        %1297 = vmatprep.subr.mxu0 0.0
        %1298 = vmatpush2.msra.mxu0 0.0
        %1299 = vmatprep.subr.mxu0 0.0
        %1300 = vmatpush2.msra.mxu0 0.0
        %1301 = vmatprep.mubr.f32.mxu0 0.0
        %1302 = vmatmul.mubr.f32.gmra.mxu0 %v1235
        %v1303 = vpop.f32.mrf.mxu0
        %v1304 = vadd.f32 0.0, %v1303
        %v1305 = vpop.f32.mrf.mxu0
        %v1306 = vadd.f32 0.0, %v1305
        %1307 = vdwg.mxu0
        %v1309 = vsel %vm1233, %v1222, 0
        %1311 = vmatprep.subr.mxu0 0.0
        %1312 = vmatpush1.msra.mxu0 0.0
        %1313 = vmatprep.subr.mxu0 0.0
        %1314 = vmatpush1.msra.mxu0 0.0
        %1315 = vmatprep.subr.mxu0 0.0
        %1316 = vmatpush1.msra.mxu0 0.0
        %1317 = vmatprep.subr.mxu0 0.0
        %1318 = vmatpush1.msra.mxu0 0.0
        %1319 = vmatprep.subr.mxu0 0.0
        %1320 = vmatpush1.msra.mxu0 0.0
        %1321 = vmatprep.subr.mxu0 0.0
        %1322 = vmatpush1.msra.mxu0 0.0
        %1323 = vmatprep.subr.mxu0 0.0
        %1324 = vmatpush1.msra.mxu0 0.0
        %1325 = vmatprep.subr.mxu0 0.0
        %1326 = vmatpush1.msra.mxu0 0.0
        %1327 = vmatprep.subr.mxu0 0.0
        %1328 = vmatpush1.msra.mxu0 0.0
        %1329 = vmatprep.subr.mxu0 0.0
        %1330 = vmatpush1.msra.mxu0 0.0
        %1331 = vmatprep.subr.mxu0 0.0
        %1332 = vmatpush1.msra.mxu0 0.0
        %1333 = vmatprep.subr.mxu0 0.0
        %1334 = vmatpush1.msra.mxu0 0.0
        %1335 = vmatprep.subr.mxu0 0.0
        %1336 = vmatpush1.msra.mxu0 0.0
        %1337 = vmatprep.subr.mxu0 0.0
        %1338 = vmatpush1.msra.mxu0 0.0
        %1339 = vmatprep.subr.mxu0 0.0
        %1340 = vmatpush1.msra.mxu0 0.0
        %1341 = vmatprep.subr.mxu0 %v1221
        %1342 = vmatpush1.msra.mxu0 %v1220
        %1343 = vmatprep.subr.mxu0 0.0
        %1344 = vmatpush2.msra.mxu0 0.0
        %1345 = vmatprep.subr.mxu0 0.0
        %1346 = vmatpush2.msra.mxu0 0.0
        %1347 = vmatprep.subr.mxu0 0.0
        %1348 = vmatpush2.msra.mxu0 0.0
        %1349 = vmatprep.subr.mxu0 0.0
        %1350 = vmatpush2.msra.mxu0 0.0
        %1351 = vmatprep.subr.mxu0 0.0
        %1352 = vmatpush2.msra.mxu0 0.0
        %1353 = vmatprep.subr.mxu0 0.0
        %1354 = vmatpush2.msra.mxu0 0.0
        %1355 = vmatprep.subr.mxu0 0.0
        %1356 = vmatpush2.msra.mxu0 0.0
        %1357 = vmatprep.subr.mxu0 0.0
        %1358 = vmatpush2.msra.mxu0 0.0
        %1359 = vmatprep.subr.mxu0 0.0
        %1360 = vmatpush2.msra.mxu0 0.0
        %1361 = vmatprep.subr.mxu0 0.0
        %1362 = vmatpush2.msra.mxu0 0.0
        %1363 = vmatprep.subr.mxu0 0.0
        %1364 = vmatpush2.msra.mxu0 0.0
        %1365 = vmatprep.subr.mxu0 0.0
        %1366 = vmatpush2.msra.mxu0 0.0
        %1367 = vmatprep.subr.mxu0 0.0
        %1368 = vmatpush2.msra.mxu0 0.0
        %1369 = vmatprep.subr.mxu0 0.0
        %1370 = vmatpush2.msra.mxu0 0.0
        %1371 = vmatprep.subr.mxu0 0.0
        %1372 = vmatpush2.msra.mxu0 0.0
        %1373 = vmatprep.subr.mxu0 0.0
        %1374 = vmatpush2.msra.mxu0 0.0
        %1375 = vmatprep.mubr.f32.mxu0 0.0
        %1376 = vmatmul.mubr.f32.gmra.mxu0 %v1309
        %v1377 = vpop.f32.mrf.mxu0
        %v1378 = vadd.f32 %v1304, %v1377
        %v1379 = vpop.f32.mrf.mxu0
        %v1380 = vadd.f32 %v1306, %v1379
        %1381 = vdwg.mxu0
        %1382 = vrot.lane.b32.xlu0 %v1212, 15
        %v1383 = vpop.permute.xlu0 %1382
        %1384 = vrot.lane.b32.xlu0 %v1213, 15
        %v1385 = vpop.permute.xlu0 %1384
        %v1386 = vsel %vm520, %v1383, %v1385
        %v1387 = vsel %vm520, %v1385, %v1383
        %v1388 = vmul.f32 %v1387, %v526
        %v1389 = vmul.f32 %v1386, %v530
        %s1390 = scalar_lea.vmem %s4, 16
        %v1391 = vld [vmem:[%s1390] sm:$0xff]
        %v1393 = vsel %vm1233, %v1391, 0
        %1395 = vmatprep.subr.mxu0 0.0
        %1396 = vmatpush1.msra.mxu0 0.0
        %1397 = vmatprep.subr.mxu0 0.0
        %1398 = vmatpush1.msra.mxu0 0.0
        %1399 = vmatprep.subr.mxu0 0.0
        %1400 = vmatpush1.msra.mxu0 0.0
        %1401 = vmatprep.subr.mxu0 0.0
        %1402 = vmatpush1.msra.mxu0 0.0
        %1403 = vmatprep.subr.mxu0 0.0
        %1404 = vmatpush1.msra.mxu0 0.0
        %1405 = vmatprep.subr.mxu0 0.0
        %1406 = vmatpush1.msra.mxu0 0.0
        %1407 = vmatprep.subr.mxu0 0.0
        %1408 = vmatpush1.msra.mxu0 0.0
        %1409 = vmatprep.subr.mxu0 0.0
        %1410 = vmatpush1.msra.mxu0 0.0
        %1411 = vmatprep.subr.mxu0 0.0
        %1412 = vmatpush1.msra.mxu0 0.0
        %1413 = vmatprep.subr.mxu0 0.0
        %1414 = vmatpush1.msra.mxu0 0.0
        %1415 = vmatprep.subr.mxu0 0.0
        %1416 = vmatpush1.msra.mxu0 0.0
        %1417 = vmatprep.subr.mxu0 0.0
        %1418 = vmatpush1.msra.mxu0 0.0
        %1419 = vmatprep.subr.mxu0 0.0
        %1420 = vmatpush1.msra.mxu0 0.0
        %1421 = vmatprep.subr.mxu0 0.0
        %1422 = vmatpush1.msra.mxu0 0.0
        %1423 = vmatprep.subr.mxu0 0.0
        %1424 = vmatpush1.msra.mxu0 0.0
        %1425 = vmatprep.subr.mxu0 %v1389
        %1426 = vmatpush1.msra.mxu0 %v1388
        %1427 = vmatprep.subr.mxu0 0.0
        %1428 = vmatpush2.msra.mxu0 0.0
        %1429 = vmatprep.subr.mxu0 0.0
        %1430 = vmatpush2.msra.mxu0 0.0
        %1431 = vmatprep.subr.mxu0 0.0
        %1432 = vmatpush2.msra.mxu0 0.0
        %1433 = vmatprep.subr.mxu0 0.0
        %1434 = vmatpush2.msra.mxu0 0.0
        %1435 = vmatprep.subr.mxu0 0.0
        %1436 = vmatpush2.msra.mxu0 0.0
        %1437 = vmatprep.subr.mxu0 0.0
        %1438 = vmatpush2.msra.mxu0 0.0
        %1439 = vmatprep.subr.mxu0 0.0
        %1440 = vmatpush2.msra.mxu0 0.0
        %1441 = vmatprep.subr.mxu0 0.0
        %1442 = vmatpush2.msra.mxu0 0.0
        %1443 = vmatprep.subr.mxu0 0.0
        %1444 = vmatpush2.msra.mxu0 0.0
        %1445 = vmatprep.subr.mxu0 0.0
        %1446 = vmatpush2.msra.mxu0 0.0
        %1447 = vmatprep.subr.mxu0 0.0
        %1448 = vmatpush2.msra.mxu0 0.0
        %1449 = vmatprep.subr.mxu0 0.0
        %1450 = vmatpush2.msra.mxu0 0.0
        %1451 = vmatprep.subr.mxu0 0.0
        %1452 = vmatpush2.msra.mxu0 0.0
        %1453 = vmatprep.subr.mxu0 0.0
        %1454 = vmatpush2.msra.mxu0 0.0
        %1455 = vmatprep.subr.mxu0 0.0
        %1456 = vmatpush2.msra.mxu0 0.0
        %1457 = vmatprep.subr.mxu0 0.0
        %1458 = vmatpush2.msra.mxu0 0.0
        %1459 = vmatprep.mubr.f32.mxu0 0.0
        %1460 = vmatmul.mubr.f32.gmra.mxu0 %v1393
        %v1461 = vpop.f32.mrf.mxu0
        %v1462 = vadd.f32 0.0, %v1461
        %v1463 = vpop.f32.mrf.mxu0
        %v1464 = vadd.f32 0.0, %v1463
        %1465 = vdwg.mxu0
        %v1466 = vadd.f32 %v1378, %v1462
        %v1467 = vadd.f32 %v1380, %v1464
        %1468 = vrot.lane.b32.xlu0 %v1212, 1
        %v1469 = vpop.permute.xlu0 %1468
        %1470 = vrot.lane.b32.xlu0 %v1213, 1
        %v1471 = vpop.permute.xlu0 %1470
        %v1472 = vsel %vm621, %v1469, %v1471
        %v1473 = vsel %vm621, %v1471, %v1469
        %v1474 = vmul.f32 %v1473, %v627
        %v1475 = vmul.f32 %v1472, %v631
        %s1476 = scalar_lea.vmem %s4, 24
        %v1477 = vld [vmem:[%s1476] sm:$0xff]
        %v1479 = vsel %vm1233, %v1477, 0
        %1481 = vmatprep.subr.mxu0 0.0
        %1482 = vmatpush1.msra.mxu0 0.0
        %1483 = vmatprep.subr.mxu0 0.0
        %1484 = vmatpush1.msra.mxu0 0.0
        %1485 = vmatprep.subr.mxu0 0.0
        %1486 = vmatpush1.msra.mxu0 0.0
        %1487 = vmatprep.subr.mxu0 0.0
        %1488 = vmatpush1.msra.mxu0 0.0
        %1489 = vmatprep.subr.mxu0 0.0
        %1490 = vmatpush1.msra.mxu0 0.0
        %1491 = vmatprep.subr.mxu0 0.0
        %1492 = vmatpush1.msra.mxu0 0.0
        %1493 = vmatprep.subr.mxu0 0.0
        %1494 = vmatpush1.msra.mxu0 0.0
        %1495 = vmatprep.subr.mxu0 0.0
        %1496 = vmatpush1.msra.mxu0 0.0
        %1497 = vmatprep.subr.mxu0 0.0
        %1498 = vmatpush1.msra.mxu0 0.0
        %1499 = vmatprep.subr.mxu0 0.0
        %1500 = vmatpush1.msra.mxu0 0.0
        %1501 = vmatprep.subr.mxu0 0.0
        %1502 = vmatpush1.msra.mxu0 0.0
        %1503 = vmatprep.subr.mxu0 0.0
        %1504 = vmatpush1.msra.mxu0 0.0
        %1505 = vmatprep.subr.mxu0 0.0
        %1506 = vmatpush1.msra.mxu0 0.0
        %1507 = vmatprep.subr.mxu0 0.0
        %1508 = vmatpush1.msra.mxu0 0.0
        %1509 = vmatprep.subr.mxu0 0.0
        %1510 = vmatpush1.msra.mxu0 0.0
        %1511 = vmatprep.subr.mxu0 %v1475
        %1512 = vmatpush1.msra.mxu0 %v1474
        %1513 = vmatprep.subr.mxu0 0.0
        %1514 = vmatpush2.msra.mxu0 0.0
        %1515 = vmatprep.subr.mxu0 0.0
        %1516 = vmatpush2.msra.mxu0 0.0
        %1517 = vmatprep.subr.mxu0 0.0
        %1518 = vmatpush2.msra.mxu0 0.0
        %1519 = vmatprep.subr.mxu0 0.0
        %1520 = vmatpush2.msra.mxu0 0.0
        %1521 = vmatprep.subr.mxu0 0.0
        %1522 = vmatpush2.msra.mxu0 0.0
        %1523 = vmatprep.subr.mxu0 0.0
        %1524 = vmatpush2.msra.mxu0 0.0
        %1525 = vmatprep.subr.mxu0 0.0
        %1526 = vmatpush2.msra.mxu0 0.0
        %1527 = vmatprep.subr.mxu0 0.0
        %1528 = vmatpush2.msra.mxu0 0.0
        %1529 = vmatprep.subr.mxu0 0.0
        %1530 = vmatpush2.msra.mxu0 0.0
        %1531 = vmatprep.subr.mxu0 0.0
        %1532 = vmatpush2.msra.mxu0 0.0
        %1533 = vmatprep.subr.mxu0 0.0
        %1534 = vmatpush2.msra.mxu0 0.0
        %1535 = vmatprep.subr.mxu0 0.0
        %1536 = vmatpush2.msra.mxu0 0.0
        %1537 = vmatprep.subr.mxu0 0.0
        %1538 = vmatpush2.msra.mxu0 0.0
        %1539 = vmatprep.subr.mxu0 0.0
        %1540 = vmatpush2.msra.mxu0 0.0
        %1541 = vmatprep.subr.mxu0 0.0
        %1542 = vmatpush2.msra.mxu0 0.0
        %1543 = vmatprep.subr.mxu0 0.0
        %1544 = vmatpush2.msra.mxu0 0.0
        %1545 = vmatprep.mubr.f32.mxu0 0.0
        %1546 = vmatmul.mubr.f32.gmra.mxu0 %v1479
        %v1547 = vpop.f32.mrf.mxu0
        %v1548 = vadd.f32 0.0, %v1547
        %v1549 = vpop.f32.mrf.mxu0
        %v1550 = vadd.f32 0.0, %v1549
        %1551 = vdwg.mxu0
        %v1552 = vadd.f32 %v1466, %v1548
        %v1553 = vadd.f32 %v1467, %v1550
        %s1554 = scalar_lea.vmem %s4, 32
        %v1555 = vld [vmem:[%s1554] sm:$0xff]
        %v1557 = vsel %vm1233, %v1555, 0
        %1559 = vmatprep.subr.mxu0 0.0
        %1560 = vmatpush1.msra.mxu0 0.0
        %1561 = vmatprep.subr.mxu0 0.0
        %1562 = vmatpush1.msra.mxu0 0.0
        %1563 = vmatprep.subr.mxu0 0.0
        %1564 = vmatpush1.msra.mxu0 0.0
        %1565 = vmatprep.subr.mxu0 0.0
        %1566 = vmatpush1.msra.mxu0 0.0
        %1567 = vmatprep.subr.mxu0 0.0
        %1568 = vmatpush1.msra.mxu0 0.0
        %1569 = vmatprep.subr.mxu0 0.0
        %1570 = vmatpush1.msra.mxu0 0.0
        %1571 = vmatprep.subr.mxu0 0.0
        %1572 = vmatpush1.msra.mxu0 0.0
        %1573 = vmatprep.subr.mxu0 0.0
        %1574 = vmatpush1.msra.mxu0 0.0
        %1575 = vmatprep.subr.mxu0 0.0
        %1576 = vmatpush1.msra.mxu0 0.0
        %1577 = vmatprep.subr.mxu0 0.0
        %1578 = vmatpush1.msra.mxu0 0.0
        %1579 = vmatprep.subr.mxu0 0.0
        %1580 = vmatpush1.msra.mxu0 0.0
        %1581 = vmatprep.subr.mxu0 0.0
        %1582 = vmatpush1.msra.mxu0 0.0
        %1583 = vmatprep.subr.mxu0 0.0
        %1584 = vmatpush1.msra.mxu0 0.0
        %1585 = vmatprep.subr.mxu0 0.0
        %1586 = vmatpush1.msra.mxu0 0.0
        %1587 = vmatprep.subr.mxu0 0.0
        %1588 = vmatpush1.msra.mxu0 0.0
        %1589 = vmatprep.subr.mxu0 %v1213
        %1590 = vmatpush1.msra.mxu0 %v1212
        %1591 = vmatprep.subr.mxu0 0.0
        %1592 = vmatpush2.msra.mxu0 0.0
        %1593 = vmatprep.subr.mxu0 0.0
        %1594 = vmatpush2.msra.mxu0 0.0
        %1595 = vmatprep.subr.mxu0 0.0
        %1596 = vmatpush2.msra.mxu0 0.0
        %1597 = vmatprep.subr.mxu0 0.0
        %1598 = vmatpush2.msra.mxu0 0.0
        %1599 = vmatprep.subr.mxu0 0.0
        %1600 = vmatpush2.msra.mxu0 0.0
        %1601 = vmatprep.subr.mxu0 0.0
        %1602 = vmatpush2.msra.mxu0 0.0
        %1603 = vmatprep.subr.mxu0 0.0
        %1604 = vmatpush2.msra.mxu0 0.0
        %1605 = vmatprep.subr.mxu0 0.0
        %1606 = vmatpush2.msra.mxu0 0.0
        %1607 = vmatprep.subr.mxu0 0.0
        %1608 = vmatpush2.msra.mxu0 0.0
        %1609 = vmatprep.subr.mxu0 0.0
        %1610 = vmatpush2.msra.mxu0 0.0
        %1611 = vmatprep.subr.mxu0 0.0
        %1612 = vmatpush2.msra.mxu0 0.0
        %1613 = vmatprep.subr.mxu0 0.0
        %1614 = vmatpush2.msra.mxu0 0.0
        %1615 = vmatprep.subr.mxu0 0.0
        %1616 = vmatpush2.msra.mxu0 0.0
        %1617 = vmatprep.subr.mxu0 0.0
        %1618 = vmatpush2.msra.mxu0 0.0
        %1619 = vmatprep.subr.mxu0 0.0
        %1620 = vmatpush2.msra.mxu0 0.0
        %1621 = vmatprep.subr.mxu0 0.0
        %1622 = vmatpush2.msra.mxu0 0.0
        %1623 = vmatprep.mubr.f32.mxu0 0.0
        %1624 = vmatmul.mubr.f32.gmra.mxu0 %v1557
        %v1625 = vpop.f32.mrf.mxu0
        %v1626 = vadd.f32 0.0, %v1625
        %v1627 = vpop.f32.mrf.mxu0
        %v1628 = vadd.f32 0.0, %v1627
        %1629 = vdwg.mxu0
        %v1630 = vadd.f32 %v1552, %v1626
        %v1631 = vadd.f32 %v1553, %v1628
        %1632 = vrot.lane.b32.xlu0 %v1212, 127
        %v1633 = vpop.permute.xlu0 %1632
        %1634 = vrot.lane.b32.xlu0 %v1213, 127
        %v1635 = vpop.permute.xlu0 %1634
        %v1636 = vsel %vm804, %v1633, %v1635
        %v1637 = vsel %vm804, %v1635, %v1633
        %v1638 = vmul.f32 %v1636, %v810
        %v1639 = vmul.f32 %v1637, %v814
        %s1640 = scalar_lea.vmem %s4, 40
        %v1641 = vld [vmem:[%s1640] sm:$0xff]
        %v1643 = vsel %vm1233, %v1641, 0
        %1645 = vmatprep.subr.mxu0 0.0
        %1646 = vmatpush1.msra.mxu0 0.0
        %1647 = vmatprep.subr.mxu0 0.0
        %1648 = vmatpush1.msra.mxu0 0.0
        %1649 = vmatprep.subr.mxu0 0.0
        %1650 = vmatpush1.msra.mxu0 0.0
        %1651 = vmatprep.subr.mxu0 0.0
        %1652 = vmatpush1.msra.mxu0 0.0
        %1653 = vmatprep.subr.mxu0 0.0
        %1654 = vmatpush1.msra.mxu0 0.0
        %1655 = vmatprep.subr.mxu0 0.0
        %1656 = vmatpush1.msra.mxu0 0.0
        %1657 = vmatprep.subr.mxu0 0.0
        %1658 = vmatpush1.msra.mxu0 0.0
        %1659 = vmatprep.subr.mxu0 0.0
        %1660 = vmatpush1.msra.mxu0 0.0
        %1661 = vmatprep.subr.mxu0 0.0
        %1662 = vmatpush1.msra.mxu0 0.0
        %1663 = vmatprep.subr.mxu0 0.0
        %1664 = vmatpush1.msra.mxu0 0.0
        %1665 = vmatprep.subr.mxu0 0.0
        %1666 = vmatpush1.msra.mxu0 0.0
        %1667 = vmatprep.subr.mxu0 0.0
        %1668 = vmatpush1.msra.mxu0 0.0
        %1669 = vmatprep.subr.mxu0 0.0
        %1670 = vmatpush1.msra.mxu0 0.0
        %1671 = vmatprep.subr.mxu0 0.0
        %1672 = vmatpush1.msra.mxu0 0.0
        %1673 = vmatprep.subr.mxu0 0.0
        %1674 = vmatpush1.msra.mxu0 0.0
        %1675 = vmatprep.subr.mxu0 %v1639
        %1676 = vmatpush1.msra.mxu0 %v1638
        %1677 = vmatprep.subr.mxu0 0.0
        %1678 = vmatpush2.msra.mxu0 0.0
        %1679 = vmatprep.subr.mxu0 0.0
        %1680 = vmatpush2.msra.mxu0 0.0
        %1681 = vmatprep.subr.mxu0 0.0
        %1682 = vmatpush2.msra.mxu0 0.0
        %1683 = vmatprep.subr.mxu0 0.0
        %1684 = vmatpush2.msra.mxu0 0.0
        %1685 = vmatprep.subr.mxu0 0.0
        %1686 = vmatpush2.msra.mxu0 0.0
        %1687 = vmatprep.subr.mxu0 0.0
        %1688 = vmatpush2.msra.mxu0 0.0
        %1689 = vmatprep.subr.mxu0 0.0
        %1690 = vmatpush2.msra.mxu0 0.0
        %1691 = vmatprep.subr.mxu0 0.0
        %1692 = vmatpush2.msra.mxu0 0.0
        %1693 = vmatprep.subr.mxu0 0.0
        %1694 = vmatpush2.msra.mxu0 0.0
        %1695 = vmatprep.subr.mxu0 0.0
        %1696 = vmatpush2.msra.mxu0 0.0
        %1697 = vmatprep.subr.mxu0 0.0
        %1698 = vmatpush2.msra.mxu0 0.0
        %1699 = vmatprep.subr.mxu0 0.0
        %1700 = vmatpush2.msra.mxu0 0.0
        %1701 = vmatprep.subr.mxu0 0.0
        %1702 = vmatpush2.msra.mxu0 0.0
        %1703 = vmatprep.subr.mxu0 0.0
        %1704 = vmatpush2.msra.mxu0 0.0
        %1705 = vmatprep.subr.mxu0 0.0
        %1706 = vmatpush2.msra.mxu0 0.0
        %1707 = vmatprep.subr.mxu0 0.0
        %1708 = vmatpush2.msra.mxu0 0.0
        %1709 = vmatprep.mubr.f32.mxu0 0.0
        %1710 = vmatmul.mubr.f32.gmra.mxu0 %v1643
        %v1711 = vpop.f32.mrf.mxu0
        %v1712 = vadd.f32 0.0, %v1711
        %v1713 = vpop.f32.mrf.mxu0
        %v1714 = vadd.f32 0.0, %v1713
        %1715 = vdwg.mxu0
        %v1716 = vadd.f32 %v1630, %v1712
        %v1717 = vadd.f32 %v1631, %v1714
        %1718 = vrot.lane.b32.xlu0 %v1212, 113
        %v1719 = vpop.permute.xlu0 %1718
        %1720 = vrot.lane.b32.xlu0 %v1213, 113
        %v1721 = vpop.permute.xlu0 %1720
        %v1722 = vsel %vm905, %v1719, %v1721
        %v1723 = vsel %vm905, %v1721, %v1719
        %v1724 = vmul.f32 %v1722, %v911
        %v1725 = vmul.f32 %v1723, %v915
        %s1726 = scalar_lea.vmem %s4, 48
        %v1727 = vld [vmem:[%s1726] sm:$0xff]
        %v1729 = vsel %vm1233, %v1727, 0
        %1731 = vmatprep.subr.mxu0 0.0
        %1732 = vmatpush1.msra.mxu0 0.0
        %1733 = vmatprep.subr.mxu0 0.0
        %1734 = vmatpush1.msra.mxu0 0.0
        %1735 = vmatprep.subr.mxu0 0.0
        %1736 = vmatpush1.msra.mxu0 0.0
        %1737 = vmatprep.subr.mxu0 0.0
        %1738 = vmatpush1.msra.mxu0 0.0
        %1739 = vmatprep.subr.mxu0 0.0
        %1740 = vmatpush1.msra.mxu0 0.0
        %1741 = vmatprep.subr.mxu0 0.0
        %1742 = vmatpush1.msra.mxu0 0.0
        %1743 = vmatprep.subr.mxu0 0.0
        %1744 = vmatpush1.msra.mxu0 0.0
        %1745 = vmatprep.subr.mxu0 0.0
        %1746 = vmatpush1.msra.mxu0 0.0
        %1747 = vmatprep.subr.mxu0 0.0
        %1748 = vmatpush1.msra.mxu0 0.0
        %1749 = vmatprep.subr.mxu0 0.0
        %1750 = vmatpush1.msra.mxu0 0.0
        %1751 = vmatprep.subr.mxu0 0.0
        %1752 = vmatpush1.msra.mxu0 0.0
        %1753 = vmatprep.subr.mxu0 0.0
        %1754 = vmatpush1.msra.mxu0 0.0
        %1755 = vmatprep.subr.mxu0 0.0
        %1756 = vmatpush1.msra.mxu0 0.0
        %1757 = vmatprep.subr.mxu0 0.0
        %1758 = vmatpush1.msra.mxu0 0.0
        %1759 = vmatprep.subr.mxu0 0.0
        %1760 = vmatpush1.msra.mxu0 0.0
        %1761 = vmatprep.subr.mxu0 %v1725
        %1762 = vmatpush1.msra.mxu0 %v1724
        %1763 = vmatprep.subr.mxu0 0.0
        %1764 = vmatpush2.msra.mxu0 0.0
        %1765 = vmatprep.subr.mxu0 0.0
        %1766 = vmatpush2.msra.mxu0 0.0
        %1767 = vmatprep.subr.mxu0 0.0
        %1768 = vmatpush2.msra.mxu0 0.0
        %1769 = vmatprep.subr.mxu0 0.0
        %1770 = vmatpush2.msra.mxu0 0.0
        %1771 = vmatprep.subr.mxu0 0.0
        %1772 = vmatpush2.msra.mxu0 0.0
        %1773 = vmatprep.subr.mxu0 0.0
        %1774 = vmatpush2.msra.mxu0 0.0
        %1775 = vmatprep.subr.mxu0 0.0
        %1776 = vmatpush2.msra.mxu0 0.0
        %1777 = vmatprep.subr.mxu0 0.0
        %1778 = vmatpush2.msra.mxu0 0.0
        %1779 = vmatprep.subr.mxu0 0.0
        %1780 = vmatpush2.msra.mxu0 0.0
        %1781 = vmatprep.subr.mxu0 0.0
        %1782 = vmatpush2.msra.mxu0 0.0
        %1783 = vmatprep.subr.mxu0 0.0
        %1784 = vmatpush2.msra.mxu0 0.0
        %1785 = vmatprep.subr.mxu0 0.0
        %1786 = vmatpush2.msra.mxu0 0.0
        %1787 = vmatprep.subr.mxu0 0.0
        %1788 = vmatpush2.msra.mxu0 0.0
        %1789 = vmatprep.subr.mxu0 0.0
        %1790 = vmatpush2.msra.mxu0 0.0
        %1791 = vmatprep.subr.mxu0 0.0
        %1792 = vmatpush2.msra.mxu0 0.0
        %1793 = vmatprep.subr.mxu0 0.0
        %1794 = vmatpush2.msra.mxu0 0.0
        %1795 = vmatprep.mubr.f32.mxu0 0.0
        %1796 = vmatmul.mubr.f32.gmra.mxu0 %v1729
        %v1797 = vpop.f32.mrf.mxu0
        %v1798 = vadd.f32 0.0, %v1797
        %v1799 = vpop.f32.mrf.mxu0
        %v1800 = vadd.f32 0.0, %v1799
        %1801 = vdwg.mxu0
        %v1802 = vadd.f32 %v1716, %v1798
        %v1803 = vadd.f32 %v1717, %v1800
        %1804 = vrot.lane.b32.xlu0 %v1212, 112
        %v1805 = vpop.permute.xlu0 %1804
        %1806 = vrot.lane.b32.xlu0 %v1213, 112
        %v1807 = vpop.permute.xlu0 %1806
        %v1808 = vsel %vm1006, %v1805, %v1807
        %v1809 = vsel %vm1006, %v1807, %v1805
        %v1810 = vmul.f32 %v1808, %v1012
        %v1811 = vmul.f32 %v1809, %v1016
        %s1812 = scalar_lea.vmem %s4, 56
        %v1813 = vld [vmem:[%s1812] sm:$0xff]
        %v1815 = vsel %vm1233, %v1813, 0
        %1817 = vmatprep.subr.mxu0 0.0
        %1818 = vmatpush1.msra.mxu0 0.0
        %1819 = vmatprep.subr.mxu0 0.0
        %1820 = vmatpush1.msra.mxu0 0.0
        %1821 = vmatprep.subr.mxu0 0.0
        %1822 = vmatpush1.msra.mxu0 0.0
        %1823 = vmatprep.subr.mxu0 0.0
        %1824 = vmatpush1.msra.mxu0 0.0
        %1825 = vmatprep.subr.mxu0 0.0
        %1826 = vmatpush1.msra.mxu0 0.0
        %1827 = vmatprep.subr.mxu0 0.0
        %1828 = vmatpush1.msra.mxu0 0.0
        %1829 = vmatprep.subr.mxu0 0.0
        %1830 = vmatpush1.msra.mxu0 0.0
        %1831 = vmatprep.subr.mxu0 0.0
        %1832 = vmatpush1.msra.mxu0 0.0
        %1833 = vmatprep.subr.mxu0 0.0
        %1834 = vmatpush1.msra.mxu0 0.0
        %1835 = vmatprep.subr.mxu0 0.0
        %1836 = vmatpush1.msra.mxu0 0.0
        %1837 = vmatprep.subr.mxu0 0.0
        %1838 = vmatpush1.msra.mxu0 0.0
        %1839 = vmatprep.subr.mxu0 0.0
        %1840 = vmatpush1.msra.mxu0 0.0
        %1841 = vmatprep.subr.mxu0 0.0
        %1842 = vmatpush1.msra.mxu0 0.0
        %1843 = vmatprep.subr.mxu0 0.0
        %1844 = vmatpush1.msra.mxu0 0.0
        %1845 = vmatprep.subr.mxu0 0.0
        %1846 = vmatpush1.msra.mxu0 0.0
        %1847 = vmatprep.subr.mxu0 %v1811
        %1848 = vmatpush1.msra.mxu0 %v1810
        %1849 = vmatprep.subr.mxu0 0.0
        %1850 = vmatpush2.msra.mxu0 0.0
        %1851 = vmatprep.subr.mxu0 0.0
        %1852 = vmatpush2.msra.mxu0 0.0
        %1853 = vmatprep.subr.mxu0 0.0
        %1854 = vmatpush2.msra.mxu0 0.0
        %1855 = vmatprep.subr.mxu0 0.0
        %1856 = vmatpush2.msra.mxu0 0.0
        %1857 = vmatprep.subr.mxu0 0.0
        %1858 = vmatpush2.msra.mxu0 0.0
        %1859 = vmatprep.subr.mxu0 0.0
        %1860 = vmatpush2.msra.mxu0 0.0
        %1861 = vmatprep.subr.mxu0 0.0
        %1862 = vmatpush2.msra.mxu0 0.0
        %1863 = vmatprep.subr.mxu0 0.0
        %1864 = vmatpush2.msra.mxu0 0.0
        %1865 = vmatprep.subr.mxu0 0.0
        %1866 = vmatpush2.msra.mxu0 0.0
        %1867 = vmatprep.subr.mxu0 0.0
        %1868 = vmatpush2.msra.mxu0 0.0
        %1869 = vmatprep.subr.mxu0 0.0
        %1870 = vmatpush2.msra.mxu0 0.0
        %1871 = vmatprep.subr.mxu0 0.0
        %1872 = vmatpush2.msra.mxu0 0.0
        %1873 = vmatprep.subr.mxu0 0.0
        %1874 = vmatpush2.msra.mxu0 0.0
        %1875 = vmatprep.subr.mxu0 0.0
        %1876 = vmatpush2.msra.mxu0 0.0
        %1877 = vmatprep.subr.mxu0 0.0
        %1878 = vmatpush2.msra.mxu0 0.0
        %1879 = vmatprep.subr.mxu0 0.0
        %1880 = vmatpush2.msra.mxu0 0.0
        %1881 = vmatprep.mubr.f32.mxu0 0.0
        %1882 = vmatmul.mubr.f32.gmra.mxu0 %v1815
        %v1883 = vpop.f32.mrf.mxu0
        %v1884 = vadd.f32 0.0, %v1883
        %v1885 = vpop.f32.mrf.mxu0
        %v1886 = vadd.f32 0.0, %v1885
        %1887 = vdwg.mxu0
        %v1888 = vadd.f32 %v1802, %v1884
        %v1889 = vadd.f32 %v1803, %v1886
        %1890 = vrot.lane.b32.xlu0 %v1212, 111
        %v1891 = vpop.permute.xlu0 %1890
        %1892 = vrot.lane.b32.xlu0 %v1213, 111
        %v1893 = vpop.permute.xlu0 %1892
        %v1894 = vsel %vm1107, %v1891, %v1893
        %v1895 = vsel %vm1107, %v1893, %v1891
        %v1896 = vmul.f32 %v1894, %v1113
        %v1897 = vmul.f32 %v1895, %v1117
        %s1898 = scalar_lea.vmem %s4, 64
        %v1899 = vld [vmem:[%s1898] sm:$0xff]
        %v1901 = vsel %vm1233, %v1899, 0
        %1903 = vmatprep.subr.mxu0 0.0
        %1904 = vmatpush1.msra.mxu0 0.0
        %1905 = vmatprep.subr.mxu0 0.0
        %1906 = vmatpush1.msra.mxu0 0.0
        %1907 = vmatprep.subr.mxu0 0.0
        %1908 = vmatpush1.msra.mxu0 0.0
        %1909 = vmatprep.subr.mxu0 0.0
        %1910 = vmatpush1.msra.mxu0 0.0
        %1911 = vmatprep.subr.mxu0 0.0
        %1912 = vmatpush1.msra.mxu0 0.0
        %1913 = vmatprep.subr.mxu0 0.0
        %1914 = vmatpush1.msra.mxu0 0.0
        %1915 = vmatprep.subr.mxu0 0.0
        %1916 = vmatpush1.msra.mxu0 0.0
        %1917 = vmatprep.subr.mxu0 0.0
        %1918 = vmatpush1.msra.mxu0 0.0
        %1919 = vmatprep.subr.mxu0 0.0
        %1920 = vmatpush1.msra.mxu0 0.0
        %1921 = vmatprep.subr.mxu0 0.0
        %1922 = vmatpush1.msra.mxu0 0.0
        %1923 = vmatprep.subr.mxu0 0.0
        %1924 = vmatpush1.msra.mxu0 0.0
        %1925 = vmatprep.subr.mxu0 0.0
        %1926 = vmatpush1.msra.mxu0 0.0
        %1927 = vmatprep.subr.mxu0 0.0
        %1928 = vmatpush1.msra.mxu0 0.0
        %1929 = vmatprep.subr.mxu0 0.0
        %1930 = vmatpush1.msra.mxu0 0.0
        %1931 = vmatprep.subr.mxu0 0.0
        %1932 = vmatpush1.msra.mxu0 0.0
        %1933 = vmatprep.subr.mxu0 %v1897
        %1934 = vmatpush1.msra.mxu0 %v1896
        %1935 = vmatprep.subr.mxu0 0.0
        %1936 = vmatpush2.msra.mxu0 0.0
        %1937 = vmatprep.subr.mxu0 0.0
        %1938 = vmatpush2.msra.mxu0 0.0
        %1939 = vmatprep.subr.mxu0 0.0
        %1940 = vmatpush2.msra.mxu0 0.0
        %1941 = vmatprep.subr.mxu0 0.0
        %1942 = vmatpush2.msra.mxu0 0.0
        %1943 = vmatprep.subr.mxu0 0.0
        %1944 = vmatpush2.msra.mxu0 0.0
        %1945 = vmatprep.subr.mxu0 0.0
        %1946 = vmatpush2.msra.mxu0 0.0
        %1947 = vmatprep.subr.mxu0 0.0
        %1948 = vmatpush2.msra.mxu0 0.0
        %1949 = vmatprep.subr.mxu0 0.0
        %1950 = vmatpush2.msra.mxu0 0.0
        %1951 = vmatprep.subr.mxu0 0.0
        %1952 = vmatpush2.msra.mxu0 0.0
        %1953 = vmatprep.subr.mxu0 0.0
        %1954 = vmatpush2.msra.mxu0 0.0
        %1955 = vmatprep.subr.mxu0 0.0
        %1956 = vmatpush2.msra.mxu0 0.0
        %1957 = vmatprep.subr.mxu0 0.0
        %1958 = vmatpush2.msra.mxu0 0.0
        %1959 = vmatprep.subr.mxu0 0.0
        %1960 = vmatpush2.msra.mxu0 0.0
        %1961 = vmatprep.subr.mxu0 0.0
        %1962 = vmatpush2.msra.mxu0 0.0
        %1963 = vmatprep.subr.mxu0 0.0
        %1964 = vmatpush2.msra.mxu0 0.0
        %1965 = vmatprep.subr.mxu0 0.0
        %1966 = vmatpush2.msra.mxu0 0.0
        %1967 = vmatprep.mubr.f32.mxu0 0.0
        %1968 = vmatmul.mubr.f32.gmra.mxu0 %v1901
        %v1969 = vpop.f32.mrf.mxu0
        %v1970 = vadd.f32 0.0, %v1969
        %v1971 = vpop.f32.mrf.mxu0
        %v1972 = vadd.f32 0.0, %v1971
        %1973 = vdwg.mxu0
        %v1974 = vadd.f32 %v1888, %v1970
        %v1975 = vadd.f32 %v1889, %v1972
        %v1976 = vld [vmem:[%s5] sm:$0xff]
        %1978 = vset.pattern.permute.xlu0 0
        %1979 = vperm.xlu0 %1978, %v1976
        %v1980 = vpop.permute.xlu0 %1979
        %v1982 = vadd.f32 %v1974, %v1980
        %v1983 = vadd.f32 %v1975, %v1980
        %v1984 = vld [vmem:[%s6] sm:$0xff]
        %v1986 = vsel %vm354, %v1984, 0
        %1988 = vmatprep.subr.mxu0 0.0
        %1989 = vmatpush1.msra.mxu0 0.0
        %1990 = vmatprep.subr.mxu0 0.0
        %1991 = vmatpush1.msra.mxu0 0.0
        %1992 = vmatprep.subr.mxu0 0.0
        %1993 = vmatpush1.msra.mxu0 0.0
        %1994 = vmatprep.subr.mxu0 0.0
        %1995 = vmatpush1.msra.mxu0 0.0
        %1996 = vmatprep.subr.mxu0 0.0
        %1997 = vmatpush1.msra.mxu0 0.0
        %1998 = vmatprep.subr.mxu0 0.0
        %1999 = vmatpush1.msra.mxu0 0.0
        %2000 = vmatprep.subr.mxu0 0.0
        %2001 = vmatpush1.msra.mxu0 0.0
        %2002 = vmatprep.subr.mxu0 0.0
        %2003 = vmatpush1.msra.mxu0 0.0
        %2004 = vmatprep.subr.mxu0 0.0
        %2005 = vmatpush1.msra.mxu0 0.0
        %2006 = vmatprep.subr.mxu0 0.0
        %2007 = vmatpush1.msra.mxu0 0.0
        %2008 = vmatprep.subr.mxu0 0.0
        %2009 = vmatpush1.msra.mxu0 0.0
        %2010 = vmatprep.subr.mxu0 0.0
        %2011 = vmatpush1.msra.mxu0 0.0
        %2012 = vmatprep.subr.mxu0 0.0
        %2013 = vmatpush1.msra.mxu0 0.0
        %2014 = vmatprep.subr.mxu0 0.0
        %2015 = vmatpush1.msra.mxu0 0.0
        %2016 = vmatprep.subr.mxu0 0.0
        %2017 = vmatpush1.msra.mxu0 0.0
        %2018 = vmatprep.subr.mxu0 %v725
        %2019 = vmatpush1.msra.mxu0 %v723
        %2020 = vmatprep.subr.mxu0 0.0
        %2021 = vmatpush2.msra.mxu0 0.0
        %2022 = vmatprep.subr.mxu0 0.0
        %2023 = vmatpush2.msra.mxu0 0.0
        %2024 = vmatprep.subr.mxu0 0.0
        %2025 = vmatpush2.msra.mxu0 0.0
        %2026 = vmatprep.subr.mxu0 0.0
        %2027 = vmatpush2.msra.mxu0 0.0
        %2028 = vmatprep.subr.mxu0 0.0
        %2029 = vmatpush2.msra.mxu0 0.0
        %2030 = vmatprep.subr.mxu0 0.0
        %2031 = vmatpush2.msra.mxu0 0.0
        %2032 = vmatprep.subr.mxu0 0.0
        %2033 = vmatpush2.msra.mxu0 0.0
        %2034 = vmatprep.subr.mxu0 0.0
        %2035 = vmatpush2.msra.mxu0 0.0
        %2036 = vmatprep.subr.mxu0 0.0
        %2037 = vmatpush2.msra.mxu0 0.0
        %2038 = vmatprep.subr.mxu0 0.0
        %2039 = vmatpush2.msra.mxu0 0.0
        %2040 = vmatprep.subr.mxu0 0.0
        %2041 = vmatpush2.msra.mxu0 0.0
        %2042 = vmatprep.subr.mxu0 0.0
        %2043 = vmatpush2.msra.mxu0 0.0
        %2044 = vmatprep.subr.mxu0 0.0
        %2045 = vmatpush2.msra.mxu0 0.0
        %2046 = vmatprep.subr.mxu0 0.0
        %2047 = vmatpush2.msra.mxu0 0.0
        %2048 = vmatprep.subr.mxu0 0.0
        %2049 = vmatpush2.msra.mxu0 0.0
        %2050 = vmatprep.subr.mxu0 0.0
        %2051 = vmatpush2.msra.mxu0 0.0
        %2052 = vmatprep.mubr.f32.mxu0 0.0
        %2053 = vmatmul.mubr.f32.gmra.mxu0 %v1986
        %v2054 = vpop.f32.mrf.mxu0
        %v2055 = vadd.f32 0.0, %v2054
        %v2056 = vpop.f32.mrf.mxu0
        %v2057 = vadd.f32 0.0, %v2056
        %2058 = vdwg.mxu0
        %v2059 = vadd.f32 %v1982, %v2055
        %v2060 = vadd.f32 %v1983, %v2057
        %v2061 = vld [vmem:[%s7] sm:$0xff]
        %2063 = vset.pattern.permute.xlu0 0
        %2064 = vperm.xlu0 %2063, %v2061
        %v2065 = vpop.permute.xlu0 %2064
        %v2067 = vadd.f32 %v2059, %v2065
        %v2068 = vadd.f32 %v2060, %v2065
        %2069 = vst [vmem:[%s299] sm:$0xff] %v2067
        %2070 = vst [vmem:[%s299 + $0x8] sm:$0xff] %v2068
        %s2071 = sand.u32 %s203, 1
        %s2072 = scalar_lea.sflag [#allocation3], %s2071
        %s2073 = sand.u32 %s203, 1
        %s2074 = smul.addr %s2073, 16
        %s2075 = scalar_lea.vmem [#allocation2], %s2074
        // Predicated region
        $region53: #{tpu_custom_call.1} parent=51 // pred_check
          %p2076 = pneg %p213
        $region54: #{tpu_custom_call.1} parent=51 // pred_check_branch
          %2078 = sbr.rel (%p2076) target = $region56
        $region55: #{tpu_custom_call.1} parent=51 // pred_region
          %s2079 = smul.u32 2, %s22
          %s2081 = ssub.s32 256, 256
          %2082 = vsyncadd %s2072, %s2081
          %s2083 = smul.addr %s2079, 128
          %s2084 = scalar_lea.hbm %s8, %s2083
          %s2086 = sshll.u32 %s2075, 4
          %s2087 = int_to_ptr.vmem [resolvable:$true] %s2086
          %2089 = dma.vmem_to_hbm [thread:$0]  %s2087, 256, %s2084, %s2072
        $region56: #{tpu_custom_call.1} parent=51 // pred_fallthru
          _
      $region52: #{tpu_custom_call.1} parent=5 // pred_fallthru
        _
      %p2090 = scmp.le.s32.totalorder 2, %s17
      // Predicated region
      $region57: #{tpu_custom_call.1} parent=5 // pred_check
        %p2091 = pneg %p2090
      $region58: #{tpu_custom_call.1} parent=5 // pred_check_branch
        %2093 = sbr.rel (%p2091) target = $region60
      $region59: #{tpu_custom_call.1} parent=5 // pred_region
        %s2094 = ssub.s32 %s17, 2
        // Predicated region
        $region61: #{tpu_custom_call.1} parent=59 // pred_check
          %p2095 = pneg %p219
        $region62: #{tpu_custom_call.1} parent=59 // pred_check_branch
          %2097 = sbr.rel (%p2095) target = $region64
        $region63: #{tpu_custom_call.1} parent=59 // pred_region
          %s2098 = sand.u32 %s204, 1
          %s2099 = scalar_lea.sflag [#allocation3], %s2098
          %s2100 = sand.u32 %s204, 1
          %s2101 = smul.addr %s2100, 16
          %s2102 = scalar_lea.vmem [#allocation2], %s2101
          %2103 = dma.done %s2099, 256
        $region64: #{tpu_custom_call.1} parent=59 // pred_fallthru
          _
      $region60: #{tpu_custom_call.1} parent=5 // pred_fallthru
        _
    $region6: #{tpu_custom_call.1} parent=1 // loop_footer
      %s21 = sadd.s32 1, %s17
    $region7: #{tpu_custom_call.1} parent=1 // loop_footer_branch
      %16 = sbr.rel target = $region3
    $region8: #{tpu_custom_call.1} parent=1 // loop_exit
      _
    %2104 = vsyncpa [#allocation3], 1
    %s2105 = scalar_lea.sflag [#allocation3], 1
    %2106 = vsyncpa %s2105, 1

</llo_original>
